<compile_context>
chip_gen: v7x
topology: tpu7x:2x2x1
jax: 0.10.0
libtpu: 0.0.40
codegen_flags: <defaults>
</compile_context>

<pallas_src>
import math
import functools

import jax
import jax.numpy as jnp
from jax.experimental import pallas as pl
from jax.experimental.pallas import tpu as pltpu


def _cdiv(a, b):
    return (a + b - 1) // b


def _round_up(a, b):
    return _cdiv(a, b) * b


def _pick_hw_tile(hw, max_tile=1024):
    """Largest divisor of hw that is <= max_tile and a multiple of 8."""
    if hw <= max_tile:
        return hw
    for cand in range(max_tile, 0, -8):
        if cand % 8 == 0 and hw % cand == 0:
            return cand
    return hw  # fall back to one tile per image


# ----------------------------------------------------------------------------
# Kernel 1: 1x1 conv + GroupNorm(32, D), two passes over HW tiles per image.
#   grid = (B, pass, n_hw_tiles); pass 0 accumulates per-channel sum/sumsq in
#   VMEM scratch, pass 1 recomputes the (cheap) conv and normalizes.
# ----------------------------------------------------------------------------
def input_proj_kernel(x_ref, w_ref, b_ref, gamma_ref, beta_ref, m_ref, mt_ref,
                      o_ref, stats_ref, *, inv_group_count):
    # x_ref: (THW, Cin), w_ref: (Cin, D) bf16, b/gamma/beta: (1, D) f32
    # m_ref: (D, G) one-hot group membership, mt_ref: (G, D)
    # stats_ref: (2, D) f32 scratch  (row 0 = sum, row 1 = sum of squares)
    p = pl.program_id(1)
    t = pl.program_id(2)

    # bf16 matmul on the MXU, f32 accumulation.
    x = x_ref[...].astype(jnp.bfloat16)
    y = jnp.dot(x, w_ref[...], preferred_element_type=jnp.float32) + b_ref[...]

    @pl.when(jnp.logical_and(p == 0, t == 0))
    def _():
        stats_ref[...] = jnp.zeros_like(stats_ref)

    @pl.when(p == 0)
    def _():
        ch = jnp.concatenate(
            [jnp.sum(y, axis=0, keepdims=True),
             jnp.sum(y * y, axis=0, keepdims=True)], axis=0)       # (2, D)
        stats_ref[...] += ch

    @pl.when(p == 1)
    def _():
        # Reduce channels -> groups and expand back with two small batched
        # matmuls (one per direction), only once per image.
        g = jnp.dot(stats_ref[...], m_ref[...],
                    preferred_element_type=jnp.float32) * inv_group_count   # (2, G)
        gc = jnp.dot(g, mt_ref[...], preferred_element_type=jnp.float32)    # (2, D)
        mean_c = gc[0:1, :]
        var_c = jnp.maximum(gc[1:2, :] - mean_c * mean_c, 0.0)  # clamp: E[x^2]-E[x]^2 can go negative
        y_norm = (y - mean_c) * jax.lax.rsqrt(var_c + 1e-5)
        o_ref[...] = y_norm * gamma_ref[...] + beta_ref[...]


def input_proj_groupnorm(x_nhwc, w, b, gamma, beta, num_groups=32,
                         max_hw_tile=1024):
    """x_nhwc: (B, H, W, Cin) -> (B, H*W, D) after 1x1 conv + GroupNorm."""
    bsz, hgt, wid, cin = x_nhwc.shape
    d = w.shape[1]
    assert d % num_groups == 0
    hw = hgt * wid
    thw = _pick_hw_tile(hw, max_hw_tile)
    n_hw = hw // thw
    x_flat = x_nhwc.reshape(bsz, hw, cin)

    # one-hot group membership matrix (D, G) (groups are contiguous channels)
    group_ids = jnp.arange(d) // (d // num_groups)
    m = jax.nn.one_hot(group_ids, num_groups, dtype=jnp.float32)   # (D, G)
    mt = m.T                                                       # (G, D)

    w_bf = w.astype(jnp.bfloat16)
    b2 = b.reshape(1, d)
    gamma2 = gamma.reshape(1, d)
    beta2 = beta.reshape(1, d)

    inv_group_count = 1.0 / float(hw * (d // num_groups))
    kernel = functools.partial(input_proj_kernel,
                               inv_group_count=inv_group_count)

    out = pl.pallas_call(
        kernel,
        out_shape=jax.ShapeDtypeStruct((bsz, hw, d), jnp.float32),
        grid_spec=pltpu.PrefetchScalarGridSpec(
            num_scalar_prefetch=0,
            grid=(bsz, 2, n_hw),
            in_specs=[
                pl.BlockSpec((None, thw, cin), lambda bi, p, t: (bi, t, 0)),
                pl.BlockSpec((cin, d), lambda bi, p, t: (0, 0)),
                pl.BlockSpec((1, d), lambda bi, p, t: (0, 0)),
                pl.BlockSpec((1, d), lambda bi, p, t: (0, 0)),
                pl.BlockSpec((1, d), lambda bi, p, t: (0, 0)),
                pl.BlockSpec((d, num_groups), lambda bi, p, t: (0, 0)),
                pl.BlockSpec((num_groups, d), lambda bi, p, t: (0, 0)),
            ],
            out_specs=pl.BlockSpec((None, thw, d), lambda bi, p, t: (bi, t, 0)),
            scratch_shapes=[pltpu.VMEM((2, d), jnp.float32)],
        ),
        compiler_params=pltpu.CompilerParams(
            dimension_semantics=("parallel", "arbitrary", "arbitrary"),
            vmem_limit_bytes=48 * 1024 * 1024),
    )(x_flat, w_bf, b2, gamma2, beta2, m, mt)
    return out


# ----------------------------------------------------------------------------
# Kernel 2: class Linear + bbox MLP + box refinement on ONE flattened slab of
#   M = L*B*nq rows, split over a small "parallel" grid of row tiles.
#   class_embed and the first bbox layer are fused into one matmul; all
#   outputs are lane-dense (padded to 128 lanes) and sliced in the wrapper.
# ----------------------------------------------------------------------------
def heads_kernel(hs_ref, ref_ref, wa_ref, ba_ref, w2_ref, b2_ref,
                 w3_ref, b3_ref, cls_ref, box_ref, *, ncp):
    h = hs_ref[...].astype(jnp.bfloat16)                       # (TM, D)

    # Fused [class_embed | bbox layer 1]: one (TM, NCP + D) matmul.
    a = jnp.dot(h, wa_ref[...], preferred_element_type=jnp.float32) + ba_ref[...]
    cls_ref[...] = a[:, :ncp]                                  # lane-dense store

    # bbox_embed MLP(D, D, 4, 3) with ReLU on hidden layers (w3 padded to 128).
    t = jnp.maximum(a[:, ncp:], 0.0).astype(jnp.bfloat16)
    t = jnp.maximum(
        jnp.dot(t, w2_ref[...], preferred_element_type=jnp.float32) + b2_ref[...],
        0.0).astype(jnp.bfloat16)
    delta = (jnp.dot(t, w3_ref[...], preferred_element_type=jnp.float32)
             + b3_ref[...])                                    # (TM, 128)

    # inverse_sigmoid(reference) (eps=1e-3 as in DINO) + delta, then sigmoid.
    r = jnp.clip(ref_ref[...], 0.0, 1.0)
    r1 = jnp.maximum(r, 1e-3)
    r2 = jnp.maximum(1.0 - r, 1e-3)
    box_ref[...] = jax.nn.sigmoid(delta + jnp.log(r1 / r2))    # lane-dense store


def run_prediction_heads(hs, reference_sig, params):
    """hs: (L, B, nq, D); reference_sig: (L, B, nq, 4) (sigmoid space,
    corresponds to reference[:-1] in the PyTorch forward)."""
    L, B, nq, d = hs.shape
    nc = params["wc"].shape[1]
    lane = 128
    ncp = _round_up(nc, lane)

    # Collapse (L, B, nq) into one row axis; split into >=2 row tiles so both
    # v7x TensorCores get work (no-op on single-TC v5e/v6e).
    M = L * B * nq
    grid_m = max(2, _cdiv(M, 512))
    tm = _round_up(_cdiv(M, grid_m), 8)
    m_pad = tm * grid_m

    hs_p = jnp.pad(hs.reshape(M, d), ((0, m_pad - M), (0, 0)))
    # Pad reference to 128 lanes with 0.5 (inverse_sigmoid(0.5) == 0).
    ref_p = jnp.pad(reference_sig.reshape(M, 4),
                    ((0, m_pad - M), (0, lane - 4)), constant_values=0.5)

    # Fuse class_embed with the first bbox layer; bf16 weights, f32 biases.
    wc_p = jnp.pad(params["wc"], ((0, 0), (0, ncp - nc)))
    bc_p = jnp.pad(params["bc"], ((0, 0), (0, ncp - nc)))
    wa = jnp.concatenate([wc_p, params["w1"]], axis=1).astype(jnp.bfloat16)
    ba = jnp.concatenate([bc_p, params["b1"]], axis=1)
    w2 = params["w2"].astype(jnp.bfloat16)
    b2 = params["b2"]
    w3p = jnp.pad(params["w3"], ((0, 0), (0, lane - 4))).astype(jnp.bfloat16)
    b3p = jnp.pad(params["b3"], ((0, 0), (0, lane - 4)))

    kernel = functools.partial(heads_kernel, ncp=ncp)
    cls_p, box_p = pl.pallas_call(
        kernel,
        out_shape=(
            jax.ShapeDtypeStruct((m_pad, ncp), jnp.float32),
            jax.ShapeDtypeStruct((m_pad, lane), jnp.float32),
        ),
        grid_spec=pltpu.PrefetchScalarGridSpec(
            num_scalar_prefetch=0,
            grid=(grid_m,),
            in_specs=[
                pl.BlockSpec((tm, d), lambda i: (i, 0)),
                pl.BlockSpec((tm, lane), lambda i: (i, 0)),
                pl.BlockSpec((d, ncp + d), lambda i: (0, 0)),
                pl.BlockSpec((1, ncp + d), lambda i: (0, 0)),
                pl.BlockSpec((d, d), lambda i: (0, 0)),
                pl.BlockSpec((1, d), lambda i: (0, 0)),
                pl.BlockSpec((d, lane), lambda i: (0, 0)),
                pl.BlockSpec((1, lane), lambda i: (0, 0)),
            ],
            out_specs=[
                pl.BlockSpec((tm, ncp), lambda i: (i, 0)),
                pl.BlockSpec((tm, lane), lambda i: (i, 0)),
            ],
        ),
        compiler_params=pltpu.CompilerParams(
            dimension_semantics=("parallel",)),
    )(hs_p, ref_p, wa, ba, w2, b2, w3p, b3p)

    outputs_class = cls_p[:M, :nc].reshape(L, B, nq, nc)
    outputs_coord = box_p[:M, :4].reshape(L, B, nq, 4)
    return outputs_class, outputs_coord


# ----------------------------------------------------------------------------
# Glue: positional encoding (PositionEmbeddingSineHW), transformer stub
# ----------------------------------------------------------------------------
def position_embedding_sine_hw(mask, num_pos_feats, tH=20.0, tW=20.0):
    # mask: (B, H, W) bool, True = padded
    not_mask = 1.0 - mask.astype(jnp.float32)
    y_embed = jnp.cumsum(not_mask, axis=1)
    x_embed = jnp.cumsum(not_mask, axis=2)
    eps = 1e-6
    scale = 2.0 * math.pi
    y_embed = y_embed / (y_embed[:, -1:, :] + eps) * scale
    x_embed = x_embed / (x_embed[:, :, -1:] + eps) * scale

    idx = jnp.arange(num_pos_feats, dtype=jnp.float32)
    dim_tx = tW ** (2.0 * jnp.floor(idx / 2.0) / num_pos_feats)
    dim_ty = tH ** (2.0 * jnp.floor(idx / 2.0) / num_pos_feats)

    pos_x = x_embed[:, :, :, None] / dim_tx
    pos_y = y_embed[:, :, :, None] / dim_ty
    pos_x = jnp.stack(
        [jnp.sin(pos_x[..., 0::2]), jnp.cos(pos_x[..., 1::2])],
        axis=4).reshape(*pos_x.shape[:3], -1)
    pos_y = jnp.stack(
        [jnp.sin(pos_y[..., 0::2]), jnp.cos(pos_y[..., 1::2])],
        axis=4).reshape(*pos_y.shape[:3], -1)
    return jnp.concatenate([pos_y, pos_x], axis=3)   # (B, H, W, 2*npf) NHWC


def transformer_stub(srcs, pos, key, num_decoder_layers, num_queries, d):
    """Deterministic stand-in for self.transformer (not a Pallas target)."""
    del pos
    bsz = srcs.shape[0]
    k1, k2 = jax.random.split(key)
    pooled = jnp.mean(srcs, axis=1)                           # (B, D)
    query_init = 0.02 * jax.random.normal(k1, (num_queries, d), jnp.float32)
    hs = jnp.stack([
        jnp.tanh(0.1 * (l + 1) * pooled[:, None, :] + query_init)
        for l in range(num_decoder_layers)
    ])                                                        # (L, B, nq, D)
    reference = jax.nn.sigmoid(
        0.5 * jax.random.normal(
            k2, (num_decoder_layers + 1, bsz, num_queries, 4), jnp.float32))
    return hs, reference


# ----------------------------------------------------------------------------
# DINOHead forward (kernel-backed)
# ----------------------------------------------------------------------------
def dino_head_forward(feat_nhwc, params, key, num_decoder_layers, num_queries):
    d = params["input_proj_w"].shape[1]

    # mask: full image valid -> all False (img_shape == batch_input_shape)
    bsz, h, w, _ = feat_nhwc.shape
    mask = jnp.zeros((bsz, h, w), dtype=bool)
    pos = position_embedding_sine_hw(mask, num_pos_feats=d // 2)

    # input_proj: 1x1 conv + GroupNorm(32, D)  (Pallas kernel)
    src = input_proj_groupnorm(
        feat_nhwc, params["input_proj_w"], params["input_proj_b"],
        params["gn_gamma"], params["gn_beta"], num_groups=32)   # (B, HW, D)

    # TODO(synk): deformable transformer is external (build_neck) — stubbed.
    hs, reference = transformer_stub(
        src, pos, key, num_decoder_layers, num_queries, d)

    # hs[0] += label_enc.weight[0, 0] * 0.0   (numerical no-op, kept for fidelity)
    hs = hs.at[0].add(params["label_enc"][0, 0] * 0.0)

    # per-layer class / bbox heads  (Pallas kernel, single flattened slab)
    outputs_class, outputs_coord = run_prediction_heads(
        hs, reference[:-1], params)

    refpts = reference[:-1][..., :2]
    out = {
        "pred_logits": outputs_class[-1],
        "pred_boxes": outputs_coord[-1],
        "pred_centers": None,
        "pred_ious": None,
        "refpts": refpts[-1],
        "aux_outputs": [
            {"pred_logits": outputs_class[i], "pred_boxes": outputs_coord[i],
             "refpts": refpts[i]}
            for i in range(num_decoder_layers - 1)
        ],
        "dn_meta": None,
    }
    return out


# ----------------------------------------------------------------------------
def make_params(key, cin, d, num_classes, labelbook_size):
    keys = jax.random.split(key, 8)
    prior_prob = 0.01
    bias_value = -math.log((1.0 - prior_prob) / prior_prob)
    params = {
        # input_proj: Conv2d(cin, d, 1) + GroupNorm(32, d)
        "input_proj_w": 0.02 * jax.random.normal(keys[0], (cin, d), jnp.float32),
        "input_proj_b": jnp.zeros((d,), jnp.float32),
        "gn_gamma": jnp.ones((d,), jnp.float32),
        "gn_beta": jnp.zeros((d,), jnp.float32),
        # class_embed: Linear(d, num_classes), bias = -log((1-p)/p)
        "wc": 0.02 * jax.random.normal(keys[1], (d, num_classes), jnp.float32),
        "bc": jnp.full((1, num_classes), bias_value, jnp.float32),
        # bbox_embed MLP(d, d, 4, 3); last layer zero-initialized
        "w1": 0.02 * jax.random.normal(keys[2], (d, d), jnp.float32),
        "b1": jnp.zeros((1, d), jnp.float32),
        "w2": 0.02 * jax.random.normal(keys[3], (d, d), jnp.float32),
        "b2": jnp.zeros((1, d), jnp.float32),
        "w3": jnp.zeros((d, 4), jnp.float32),
        "b3": jnp.zeros((1, 4), jnp.float32),
        # label_enc: Embedding(labelbook_size + 1, d)
        "label_enc": 0.02 * jax.random.normal(
            keys[4], (labelbook_size + 1, d), jnp.float32),
    }
    return params


if __name__ == "__main__":
    # small, deterministic config
    BATCH = 2
    H = W = 16
    CIN = 64            # backbone feature channels (single feature level)
    EMBED = 128         # embed_dims
    NUM_CLASSES = 16
    NUM_QUERIES = 16
    NUM_DEC_LAYERS = 3
    LABELBOOK = 20

    key = jax.random.PRNGKey(0)
    k_feat, k_params, k_tfm = jax.random.split(key, 3)

    # layout: NHWC feature map (PyTorch module would receive NCHW)
    feat = jax.random.normal(k_feat, (BATCH, H, W, CIN), jnp.float32)
    params = make_params(k_params, CIN, EMBED, NUM_CLASSES, LABELBOOK)

    fwd = jax.jit(functools.partial(
        dino_head_forward,
        num_decoder_layers=NUM_DEC_LAYERS,
        num_queries=NUM_QUERIES))
    out = fwd(feat, params, k_tfm)
    jax.block_until_ready(out["pred_logits"])
    jax.block_until_ready(out["pred_boxes"])

    assert out["pred_logits"].shape == (BATCH, NUM_QUERIES, NUM_CLASSES)
    assert out["pred_boxes"].shape == (BATCH, NUM_QUERIES, 4)
    assert len(out["aux_outputs"]) == NUM_DEC_LAYERS - 1
    print("KERNEL_OK")
</pallas_src>

<mosaic_0001>
module attributes {stable_mosaic.version = 11 : i64} {
  func.func @input_proj_kernel(%arg0: i32, %arg1: i32, %arg2: i32, %arg3: memref<1x256x64xf32, #tpu.memory_space<vmem>>, %arg4: memref<64x128xbf16, #tpu.memory_space<vmem>>, %arg5: memref<1x128xf32, #tpu.memory_space<vmem>>, %arg6: memref<1x128xf32, #tpu.memory_space<vmem>>, %arg7: memref<1x128xf32, #tpu.memory_space<vmem>>, %arg8: memref<128x32xf32, #tpu.memory_space<vmem>>, %arg9: memref<32x128xf32, #tpu.memory_space<vmem>>, %arg10: memref<1x256x128xf32, #tpu.memory_space<vmem>>, %arg11: memref<2x128xf32, #tpu.memory_space<vmem>>) attributes {dimension_semantics = [#tpu.dimension_semantics<parallel>, #tpu.dimension_semantics<arbitrary>, #tpu.dimension_semantics<arbitrary>], iteration_bounds = array<i64: 2, 2, 1>, scalar_prefetch = 0 : i64, scratch_operands = 1 : i64, tpu.core_type = #tpu.core_type<tc>, window_params = [{transform_indices = @transform_0, window_bounds = array<i64: 1, 256, 64>}, {pipeline_mode = #tpu.pipeline_mode<synchronous>, transform_indices = @transform_1, window_bounds = array<i64: 64, 128>}, {pipeline_mode = #tpu.pipeline_mode<synchronous>, transform_indices = @transform_2, window_bounds = array<i64: 1, 128>}, {pipeline_mode = #tpu.pipeline_mode<synchronous>, transform_indices = @transform_3, window_bounds = array<i64: 1, 128>}, {pipeline_mode = #tpu.pipeline_mode<synchronous>, transform_indices = @transform_4, window_bounds = array<i64: 1, 128>}, {pipeline_mode = #tpu.pipeline_mode<synchronous>, transform_indices = @transform_5, window_bounds = array<i64: 128, 32>}, {pipeline_mode = #tpu.pipeline_mode<synchronous>, transform_indices = @transform_6, window_bounds = array<i64: 32, 128>}, {transform_indices = @transform_7, window_bounds = array<i64: 1, 256, 128>}]} {
    %c0 = arith.constant 0 : index
    %c0_0 = arith.constant 0 : index
    %c0_1 = arith.constant 0 : index
    %0 = vector.load %arg3[%c0, %c0_0, %c0_1] : memref<1x256x64xf32, #tpu.memory_space<vmem>>, vector<1x256x64xf32>
    %1 = vector.shape_cast %0 : vector<1x256x64xf32> to vector<256x64xf32>
    %2 = arith.truncf %1 : vector<256x64xf32> to vector<256x64xbf16>
    %c0_2 = arith.constant 0 : index
    %c0_3 = arith.constant 0 : index
    %3 = vector.load %arg4[%c0_2, %c0_3] : memref<64x128xbf16, #tpu.memory_space<vmem>>, vector<64x128xbf16>
    %cst = arith.constant dense<0.000000e+00> : vector<256x128xf32>
    %4 = tpu.matmul %2, %3, %cst {dimension_numbers = #tpu.dot_dimension_numbers<[1], [0], [0], [1], [0, 0, 1, 1], [], []>} : vector<256x64xbf16>, vector<64x128xbf16>, vector<256x128xf32> -> vector<256x128xf32>
    %c0_4 = arith.constant 0 : index
    %c0_5 = arith.constant 0 : index
    %5 = vector.load %arg5[%c0_4, %c0_5] : memref<1x128xf32, #tpu.memory_space<vmem>>, vector<1x128xf32>
    %6 = vector.broadcast %5 : vector<1x128xf32> to vector<256x128xf32>
    %7 = arith.addf %4, %6 : vector<256x128xf32>
    %c0_i32 = arith.constant 0 : i32
    %8 = arith.cmpi eq, %arg1, %c0_i32 : i32
    %c0_i32_6 = arith.constant 0 : i32
    %9 = arith.cmpi eq, %arg2, %c0_i32_6 : i32
    %10 = arith.andi %8, %9 : i1
    %11 = arith.extui %10 : i1 to i32
    %c0_i32_7 = arith.constant 0 : i32
    %12 = arith.cmpi ne, %11, %c0_i32_7 : i32
    scf.if %12 {
      %cst_11 = arith.constant 0.000000e+00 : f32
      %19 = vector.broadcast %cst_11 : f32 to vector<2x128xf32>
      %c0_12 = arith.constant 0 : index
      %c0_13 = arith.constant 0 : index
      %20 = vector.load %arg11[%c0_12, %c0_13] : memref<2x128xf32, #tpu.memory_space<vmem>>, vector<2x128xf32>
      tpu.vector_store %arg11[%c0_12, %c0_13], %19 {strides = array<i32>} : memref<2x128xf32, #tpu.memory_space<vmem>>, vector<2x128xf32>,
    } else {
    }
    %c0_i32_8 = arith.constant 0 : i32
    %13 = arith.cmpi eq, %arg1, %c0_i32_8 : i32
    %14 = arith.extui %13 : i1 to i32
    %c0_i32_9 = arith.constant 0 : i32
    %15 = arith.cmpi ne, %14, %c0_i32_9 : i32
    scf.if %15 {
      %cst_11 = arith.constant dense<0.000000e+00> : vector<128xf32>
      %19 = vector.multi_reduction <add>, %7, %cst_11 [0] : vector<256x128xf32> to vector<128xf32>
      %20 = vector.shape_cast %19 : vector<128xf32> to vector<1x128xf32>
      %21 = arith.mulf %7, %7 : vector<256x128xf32>
      %cst_12 = arith.constant dense<0.000000e+00> : vector<128xf32>
      %22 = vector.multi_reduction <add>, %21, %cst_12 [0] : vector<256x128xf32> to vector<128xf32>
      %23 = vector.shape_cast %22 : vector<128xf32> to vector<1x128xf32>
      %24 = tpu.concatenate %20, %23 in 0 : vector<1x128xf32>, vector<1x128xf32> -> vector<2x128xf32>
      %c0_13 = arith.constant 0 : index
      %c0_14 = arith.constant 0 : index
      %25 = vector.load %arg11[%c0_13, %c0_14] : memref<2x128xf32, #tpu.memory_space<vmem>>, vector<2x128xf32>
      %26 = arith.addf %25, %24 : vector<2x128xf32>
      %c0_15 = arith.constant 0 : index
      %c0_16 = arith.constant 0 : index
      %27 = vector.load %arg11[%c0_15, %c0_16] : memref<2x128xf32, #tpu.memory_space<vmem>>, vector<2x128xf32>
      tpu.vector_store %arg11[%c0_15, %c0_16], %26 {strides = array<i32>} : memref<2x128xf32, #tpu.memory_space<vmem>>, vector<2x128xf32>,
    } else {
    }
    %c1_i32 = arith.constant 1 : i32
    %16 = arith.cmpi eq, %arg1, %c1_i32 : i32
    %17 = arith.extui %16 : i1 to i32
    %c0_i32_10 = arith.constant 0 : i32
    %18 = arith.cmpi ne, %17, %c0_i32_10 : i32
    scf.if %18 {
      %c0_11 = arith.constant 0 : index
      %c0_12 = arith.constant 0 : index
      %19 = vector.load %arg11[%c0_11, %c0_12] : memref<2x128xf32, #tpu.memory_space<vmem>>, vector<2x128xf32>
      %c0_13 = arith.constant 0 : index
      %c0_14 = arith.constant 0 : index
      %20 = vector.load %arg8[%c0_13, %c0_14] : memref<128x32xf32, #tpu.memory_space<vmem>>, vector<128x32xf32>
      %cst_15 = arith.constant dense<0.000000e+00> : vector<2x32xf32>
      %21 = tpu.matmul %19, %20, %cst_15 {dimension_numbers = #tpu.dot_dimension_numbers<[1], [0], [0], [1], [0, 0, 1, 1], [], []>} : vector<2x128xf32>, vector<128x32xf32>, vector<2x32xf32> -> vector<2x32xf32>
      %cst_16 = arith.constant 9.765625E-4 : f32
      %22 = vector.broadcast %cst_16 : f32 to vector<2x32xf32>
      %23 = arith.mulf %21, %22 : vector<2x32xf32>
      %c0_17 = arith.constant 0 : index
      %c0_18 = arith.constant 0 : index
      %24 = vector.load %arg9[%c0_17, %c0_18] : memref<32x128xf32, #tpu.memory_space<vmem>>, vector<32x128xf32>
      %cst_19 = arith.constant dense<0.000000e+00> : vector<2x128xf32>
      %25 = tpu.matmul %23, %24, %cst_19 {dimension_numbers = #tpu.dot_dimension_numbers<[1], [0], [0], [1], [0, 0, 1, 1], [], []>} : vector<2x32xf32>, vector<32x128xf32>, vector<2x128xf32> -> vector<2x128xf32>
      %26 = vector.extract_strided_slice %25 {offsets = [0, 0], sizes = [1, 128], strides = [1, 1]} : vector<2x128xf32> to vector<1x128xf32>
      %27 = vector.extract_strided_slice %25 {offsets = [1, 0], sizes = [1, 128], strides = [1, 1]} : vector<2x128xf32> to vector<1x128xf32>
      %28 = arith.mulf %26, %26 : vector<1x128xf32>
      %29 = arith.subf %27, %28 : vector<1x128xf32>
      %cst_20 = arith.constant 0.000000e+00 : f32
      %30 = vector.broadcast %cst_20 : f32 to vector<1x128xf32>
      %31 = arith.maximumf %29, %30 : vector<1x128xf32>
      %32 = vector.broadcast %26 : vector<1x128xf32> to vector<256x128xf32>
      %33 = arith.subf %7, %32 : vector<256x128xf32>
      %cst_21 = arith.constant 9.99999974E-6 : f32
      %34 = vector.broadcast %cst_21 : f32 to vector<1x128xf32>
      %35 = arith.addf %31, %34 : vector<1x128xf32>
      %36 = math.rsqrt %35 : vector<1x128xf32>
      %37 = vector.broadcast %36 : vector<1x128xf32> to vector<256x128xf32>
      %38 = arith.mulf %33, %37 : vector<256x128xf32>
      %c0_22 = arith.constant 0 : index
      %c0_23 = arith.constant 0 : index
      %39 = vector.load %arg6[%c0_22, %c0_23] : memref<1x128xf32, #tpu.memory_space<vmem>>, vector<1x128xf32>
      %40 = vector.broadcast %39 : vector<1x128xf32> to vector<256x128xf32>
      %41 = arith.mulf %38, %40 : vector<256x128xf32>
      %c0_24 = arith.constant 0 : index
      %c0_25 = arith.constant 0 : index
      %42 = vector.load %arg7[%c0_24, %c0_25] : memref<1x128xf32, #tpu.memory_space<vmem>>, vector<1x128xf32>
      %43 = vector.broadcast %42 : vector<1x128xf32> to vector<256x128xf32>
      %44 = arith.addf %41, %43 : vector<256x128xf32>
      %c0_26 = arith.constant 0 : index
      %c0_27 = arith.constant 0 : index
      %c0_28 = arith.constant 0 : index
      %45 = vector.load %arg10[%c0_26, %c0_27, %c0_28] : memref<1x256x128xf32, #tpu.memory_space<vmem>>, vector<1x256x128xf32>
      %46 = vector.shape_cast %45 : vector<1x256x128xf32> to vector<256x128xf32>
      %47 = vector.shape_cast %44 : vector<256x128xf32> to vector<1x256x128xf32>
      tpu.vector_store %arg10[%c0_26, %c0_27, %c0_28], %47 {strides = array<i32>} : memref<1x256x128xf32, #tpu.memory_space<vmem>>, vector<1x256x128xf32>,
    } else {
    }
    return
  }
  func.func @transform_0(%arg0: i32, %arg1: i32, %arg2: i32) -> (i32, i32, i32) {
    %c0_i32 = arith.constant 0 : i32
    %c0_i32_0 = arith.constant 0 : i32
    return %arg0, %arg2, %c0_i32 : i32, i32, i32
  }
  func.func @transform_1(%arg0: i32, %arg1: i32, %arg2: i32) -> (i32, i32) {
    %c0_i32 = arith.constant 0 : i32
    %c0_i32_0 = arith.constant 0 : i32
    %c0_i32_1 = arith.constant 0 : i32
    return %c0_i32, %c0_i32_0 : i32, i32
  }
  func.func @transform_2(%arg0: i32, %arg1: i32, %arg2: i32) -> (i32, i32) {
    %c0_i32 = arith.constant 0 : i32
    %c0_i32_0 = arith.constant 0 : i32
    %c0_i32_1 = arith.constant 0 : i32
    return %c0_i32, %c0_i32_0 : i32, i32
  }
  func.func @transform_3(%arg0: i32, %arg1: i32, %arg2: i32) -> (i32, i32) {
    %c0_i32 = arith.constant 0 : i32
    %c0_i32_0 = arith.constant 0 : i32
    %c0_i32_1 = arith.constant 0 : i32
    return %c0_i32, %c0_i32_0 : i32, i32
  }
  func.func @transform_4(%arg0: i32, %arg1: i32, %arg2: i32) -> (i32, i32) {
    %c0_i32 = arith.constant 0 : i32
    %c0_i32_0 = arith.constant 0 : i32
    %c0_i32_1 = arith.constant 0 : i32
    return %c0_i32, %c0_i32_0 : i32, i32
  }
  func.func @transform_5(%arg0: i32, %arg1: i32, %arg2: i32) -> (i32, i32) {
    %c0_i32 = arith.constant 0 : i32
    %c0_i32_0 = arith.constant 0 : i32
    %c0_i32_1 = arith.constant 0 : i32
    return %c0_i32, %c0_i32_0 : i32, i32
  }
  func.func @transform_6(%arg0: i32, %arg1: i32, %arg2: i32) -> (i32, i32) {
    %c0_i32 = arith.constant 0 : i32
    %c0_i32_0 = arith.constant 0 : i32
    %c0_i32_1 = arith.constant 0 : i32
    return %c0_i32, %c0_i32_0 : i32, i32
  }
  func.func @transform_7(%arg0: i32, %arg1: i32, %arg2: i32) -> (i32, i32, i32) {
    %c0_i32 = arith.constant 0 : i32
    %c0_i32_0 = arith.constant 0 : i32
    return %arg0, %arg2, %c0_i32 : i32, i32, i32
  }
}

module attributes {stable_mosaic.version = 11 : i64} {
  func.func @heads_kernel(%arg0: i32, %arg1: memref<48x128xf32, #tpu.memory_space<vmem>>, %arg2: memref<48x128xf32, #tpu.memory_space<vmem>>, %arg3: memref<128x256xbf16, #tpu.memory_space<vmem>>, %arg4: memref<1x256xf32, #tpu.memory_space<vmem>>, %arg5: memref<128x128xbf16, #tpu.memory_space<vmem>>, %arg6: memref<1x128xf32, #tpu.memory_space<vmem>>, %arg7: memref<128x128xbf16, #tpu.memory_space<vmem>>, %arg8: memref<1x128xf32, #tpu.memory_space<vmem>>, %arg9: memref<48x128xf32, #tpu.memory_space<vmem>>, %arg10: memref<48x128xf32, #tpu.memory_space<vmem>>) attributes {dimension_semantics = [#tpu.dimension_semantics<parallel>], iteration_bounds = array<i64: 2>, scalar_prefetch = 0 : i64, scratch_operands = 0 : i64, tpu.core_type = #tpu.core_type<tc>, window_params = [{transform_indices = @transform_0, window_bounds = array<i64: 48, 128>}, {transform_indices = @transform_1, window_bounds = array<i64: 48, 128>}, {pipeline_mode = #tpu.pipeline_mode<synchronous>, transform_indices = @transform_2, window_bounds = array<i64: 128, 256>}, {pipeline_mode = #tpu.pipeline_mode<synchronous>, transform_indices = @transform_3, window_bounds = array<i64: 1, 256>}, {pipeline_mode = #tpu.pipeline_mode<synchronous>, transform_indices = @transform_4, window_bounds = array<i64: 128, 128>}, {pipeline_mode = #tpu.pipeline_mode<synchronous>, transform_indices = @transform_5, window_bounds = array<i64: 1, 128>}, {pipeline_mode = #tpu.pipeline_mode<synchronous>, transform_indices = @transform_6, window_bounds = array<i64: 128, 128>}, {pipeline_mode = #tpu.pipeline_mode<synchronous>, transform_indices = @transform_7, window_bounds = array<i64: 1, 128>}, {transform_indices = @transform_8, window_bounds = array<i64: 48, 128>}, {transform_indices = @transform_9, window_bounds = array<i64: 48, 128>}]} {
    %c0 = arith.constant 0 : index
    %c0_0 = arith.constant 0 : index
    %0 = vector.load %arg1[%c0, %c0_0] : memref<48x128xf32, #tpu.memory_space<vmem>>, vector<48x128xf32>
    %1 = arith.truncf %0 : vector<48x128xf32> to vector<48x128xbf16>
    %c0_1 = arith.constant 0 : index
    %c0_2 = arith.constant 0 : index
    %2 = vector.load %arg3[%c0_1, %c0_2] : memref<128x256xbf16, #tpu.memory_space<vmem>>, vector<128x256xbf16>
    %cst = arith.constant dense<0.000000e+00> : vector<48x256xf32>
    %3 = tpu.matmul %1, %2, %cst {dimension_numbers = #tpu.dot_dimension_numbers<[1], [0], [0], [1], [0, 0, 1, 1], [], []>} : vector<48x128xbf16>, vector<128x256xbf16>, vector<48x256xf32> -> vector<48x256xf32>
    %c0_3 = arith.constant 0 : index
    %c0_4 = arith.constant 0 : index
    %4 = vector.load %arg4[%c0_3, %c0_4] : memref<1x256xf32, #tpu.memory_space<vmem>>, vector<1x256xf32>
    %5 = vector.broadcast %4 : vector<1x256xf32> to vector<48x256xf32>
    %6 = arith.addf %3, %5 : vector<48x256xf32>
    %7 = vector.extract_strided_slice %6 {offsets = [0, 0], sizes = [48, 128], strides = [1, 1]} : vector<48x256xf32> to vector<48x128xf32>
    %c0_5 = arith.constant 0 : index
    %c0_6 = arith.constant 0 : index
    %8 = vector.load %arg9[%c0_5, %c0_6] : memref<48x128xf32, #tpu.memory_space<vmem>>, vector<48x128xf32>
    tpu.vector_store %arg9[%c0_5, %c0_6], %7 {strides = array<i32>} : memref<48x128xf32, #tpu.memory_space<vmem>>, vector<48x128xf32>,
    %9 = vector.extract_strided_slice %6 {offsets = [0, 128], sizes = [48, 128], strides = [1, 1]} : vector<48x256xf32> to vector<48x128xf32>
    %cst_7 = arith.constant 0.000000e+00 : f32
    %10 = vector.broadcast %cst_7 : f32 to vector<48x128xf32>
    %11 = arith.maximumf %9, %10 : vector<48x128xf32>
    %12 = arith.truncf %11 : vector<48x128xf32> to vector<48x128xbf16>
    %c0_8 = arith.constant 0 : index
    %c0_9 = arith.constant 0 : index
    %13 = vector.load %arg5[%c0_8, %c0_9] : memref<128x128xbf16, #tpu.memory_space<vmem>>, vector<128x128xbf16>
    %cst_10 = arith.constant dense<0.000000e+00> : vector<48x128xf32>
    %14 = tpu.matmul %12, %13, %cst_10 {dimension_numbers = #tpu.dot_dimension_numbers<[1], [0], [0], [1], [0, 0, 1, 1], [], []>} : vector<48x128xbf16>, vector<128x128xbf16>, vector<48x128xf32> -> vector<48x128xf32>
    %c0_11 = arith.constant 0 : index
    %c0_12 = arith.constant 0 : index
    %15 = vector.load %arg6[%c0_11, %c0_12] : memref<1x128xf32, #tpu.memory_space<vmem>>, vector<1x128xf32>
    %16 = vector.broadcast %15 : vector<1x128xf32> to vector<48x128xf32>
    %17 = arith.addf %14, %16 : vector<48x128xf32>
    %cst_13 = arith.constant 0.000000e+00 : f32
    %18 = vector.broadcast %cst_13 : f32 to vector<48x128xf32>
    %19 = arith.maximumf %17, %18 : vector<48x128xf32>
    %20 = arith.truncf %19 : vector<48x128xf32> to vector<48x128xbf16>
    %c0_14 = arith.constant 0 : index
    %c0_15 = arith.constant 0 : index
    %21 = vector.load %arg7[%c0_14, %c0_15] : memref<128x128xbf16, #tpu.memory_space<vmem>>, vector<128x128xbf16>
    %cst_16 = arith.constant dense<0.000000e+00> : vector<48x128xf32>
    %22 = tpu.matmul %20, %21, %cst_16 {dimension_numbers = #tpu.dot_dimension_numbers<[1], [0], [0], [1], [0, 0, 1, 1], [], []>} : vector<48x128xbf16>, vector<128x128xbf16>, vector<48x128xf32> -> vector<48x128xf32>
    %c0_17 = arith.constant 0 : index
    %c0_18 = arith.constant 0 : index
    %23 = vector.load %arg8[%c0_17, %c0_18] : memref<1x128xf32, #tpu.memory_space<vmem>>, vector<1x128xf32>
    %24 = vector.broadcast %23 : vector<1x128xf32> to vector<48x128xf32>
    %25 = arith.addf %22, %24 : vector<48x128xf32>
    %c0_19 = arith.constant 0 : index
    %c0_20 = arith.constant 0 : index
    %26 = vector.load %arg2[%c0_19, %c0_20] : memref<48x128xf32, #tpu.memory_space<vmem>>, vector<48x128xf32>
    %cst_21 = arith.constant 0.000000e+00 : f32
    %cst_22 = arith.constant 1.000000e+00 : f32
    %27 = vector.broadcast %cst_21 : f32 to vector<48x128xf32>
    %28 = arith.maximumf %27, %26 : vector<48x128xf32>
    %29 = vector.broadcast %cst_22 : f32 to vector<48x128xf32>
    %30 = arith.minimumf %29, %28 : vector<48x128xf32>
    %cst_23 = arith.constant 1.000000e-03 : f32
    %31 = vector.broadcast %cst_23 : f32 to vector<48x128xf32>
    %32 = arith.maximumf %30, %31 : vector<48x128xf32>
    %cst_24 = arith.constant 1.000000e+00 : f32
    %33 = vector.broadcast %cst_24 : f32 to vector<48x128xf32>
    %34 = arith.subf %33, %30 : vector<48x128xf32>
    %cst_25 = arith.constant 1.000000e-03 : f32
    %35 = vector.broadcast %cst_25 : f32 to vector<48x128xf32>
    %36 = arith.maximumf %34, %35 : vector<48x128xf32>
    %37 = arith.divf %32, %36 : vector<48x128xf32>
    %38 = math.log %37 : vector<48x128xf32>
    %39 = arith.addf %25, %38 : vector<48x128xf32>
    %40 = arith.negf %39 : vector<48x128xf32>
    %41 = math.exp %40 : vector<48x128xf32>
    %cst_26 = arith.constant 1.000000e+00 : f32
    %42 = vector.broadcast %cst_26 : f32 to vector<48x128xf32>
    %43 = arith.addf %42, %41 : vector<48x128xf32>
    %44 = arith.divf %42, %43 : vector<48x128xf32>
    %c0_27 = arith.constant 0 : index
    %c0_28 = arith.constant 0 : index
    %45 = vector.load %arg10[%c0_27, %c0_28] : memref<48x128xf32, #tpu.memory_space<vmem>>, vector<48x128xf32>
    tpu.vector_store %arg10[%c0_27, %c0_28], %44 {strides = array<i32>} : memref<48x128xf32, #tpu.memory_space<vmem>>, vector<48x128xf32>,
    return
  }
  func.func @transform_0(%arg0: i32) -> (i32, i32) {
    %c0_i32 = arith.constant 0 : i32
    %c0_i32_0 = arith.constant 0 : i32
    return %arg0, %c0_i32 : i32, i32
  }
  func.func @transform_1(%arg0: i32) -> (i32, i32) {
    %c0_i32 = arith.constant 0 : i32
    %c0_i32_0 = arith.constant 0 : i32
    return %arg0, %c0_i32 : i32, i32
  }
  func.func @transform_2(%arg0: i32) -> (i32, i32) {
    %c0_i32 = arith.constant 0 : i32
    %c0_i32_0 = arith.constant 0 : i32
    %c0_i32_1 = arith.constant 0 : i32
    return %c0_i32, %c0_i32_0 : i32, i32
  }
  func.func @transform_3(%arg0: i32) -> (i32, i32) {
    %c0_i32 = arith.constant 0 : i32
    %c0_i32_0 = arith.constant 0 : i32
    %c0_i32_1 = arith.constant 0 : i32
    return %c0_i32, %c0_i32_0 : i32, i32
  }
  func.func @transform_4(%arg0: i32) -> (i32, i32) {
    %c0_i32 = arith.constant 0 : i32
    %c0_i32_0 = arith.constant 0 : i32
    %c0_i32_1 = arith.constant 0 : i32
    return %c0_i32, %c0_i32_0 : i32, i32
  }
  func.func @transform_5(%arg0: i32) -> (i32, i32) {
    %c0_i32 = arith.constant 0 : i32
    %c0_i32_0 = arith.constant 0 : i32
    %c0_i32_1 = arith.constant 0 : i32
    return %c0_i32, %c0_i32_0 : i32, i32
  }
  func.func @transform_6(%arg0: i32) -> (i32, i32) {
    %c0_i32 = arith.constant 0 : i32
    %c0_i32_0 = arith.constant 0 : i32
    %c0_i32_1 = arith.constant 0 : i32
    return %c0_i32, %c0_i32_0 : i32, i32
  }
  func.func @transform_7(%arg0: i32) -> (i32, i32) {
    %c0_i32 = arith.constant 0 : i32
    %c0_i32_0 = arith.constant 0 : i32
    %c0_i32_1 = arith.constant 0 : i32
    return %c0_i32, %c0_i32_0 : i32, i32
  }
  func.func @transform_8(%arg0: i32) -> (i32, i32) {
    %c0_i32 = arith.constant 0 : i32
    %c0_i32_0 = arith.constant 0 : i32
    return %arg0, %c0_i32 : i32, i32
  }
  func.func @transform_9(%arg0: i32) -> (i32, i32) {
    %c0_i32 = arith.constant 0 : i32
    %c0_i32_0 = arith.constant 0 : i32
    return %arg0, %c0_i32 : i32, i32
  }
}

</mosaic_0001>

<llo_original>
// kernel: dino_head_forward.2
$region0: #{dino_head_forward.2}
  #allocation0 [shape = 'u32[]', space=smem, size = 0x4, offset = 0x4, fixed_abs, tag = 'smem constant byte address 0x4 - core index']
  #allocation1 [shape = 'u32[144,128]{1,0:T(1,128)}', space=vmem, size = 0x12000, scoped, tag = 'internal scratch']
  #allocation2 [shape = 'f32[2,128]{1,0:T(2,128)}', space=vmem, size = 0x400, scoped, tag = 'scratch operand']
  %s0 = inlined_call_operand.hbm [shape: f32[2,256,64], index: 0, kind: input, shape index: {}]
  %s1 = inlined_call_operand.vmem [shape: bf16[64,128], index: 1, kind: input, shape index: {}]
  %s2 = inlined_call_operand.vmem [shape: f32[1,128], index: 2, kind: input, shape index: {}]
  %s3 = inlined_call_operand.vmem [shape: f32[1,128], index: 3, kind: input, shape index: {}]
  %s4 = inlined_call_operand.vmem [shape: f32[1,128], index: 4, kind: input, shape index: {}]
  %s5 = inlined_call_operand.vmem [shape: f32[128,32], index: 5, kind: input, shape index: {}]
  %s6 = inlined_call_operand.vmem [shape: f32[32,128], index: 6, kind: input, shape index: {}]
  %s7 = inlined_call_operand.vmem [shape: f32[2,256,128], index: 7, kind: output, shape index: {}]
  %s8 = sld [smem:[#allocation0]]
  $region77: #{dino_head_forward.2} parent=0
    _
  %s10 = ssub.s32 1, %s8
  %s11 = scalar_select 0, %s10, %s8
  $region1: #{dino_head_forward.2} parent=0
    #allocation3 [shape = 'u8[262144]{0}', space=vmem, size = 0x40000, scoped, tag = 'input window, operand 0']
    #allocation4 [shape = 's32[2]{0}', space=sflag, size = 0x8, scoped, tag = 'scoped memory for dino_head_forward.2']
    %12 = vsyncpa [#allocation4], 0
    %s13 = scalar_lea.sflag [#allocation4], 1
    %14 = vsyncpa %s13, 0
    loop: start=0, step=1, limit=6
    $region2: #{dino_head_forward.2} parent=1 // loop_pre_header
      _
    $region3: #{dino_head_forward.2} parent=1 // loop_header
      %s16 = sphi 0, %s20
      %p17 = scmp.ge.s32.totalorder %s16, 6
      %s23 = sphi 0, %s42
      %s24 = sphi 0, %s38
      %s25 = sphi 0, %s34
      %s26 = sphi 0, %s23
      %s27 = sphi 0, %s24
      %s28 = sphi 0, %s25
      %s29 = sphi 0, %s26
      %s30 = sphi 0, %s27
      %s31 = sphi 0, %s28
      %s47 = sphi 0, %s49
      %s50 = sphi 0, %s47
      %s51 = sphi 0, %s50
      %s67 = sphi 0, %s51
      %s71 = sphi 0, %s71
      %s73 = sphi 0, %s71
      %s74 = sphi 0, %s73
      %s88 = sphi 0, %s74
      %s92 = sphi 0, %s92
      %s94 = sphi 0, %s92
      %s95 = sphi 0, %s94
      %s109 = sphi 0, %s95
      %s113 = sphi 0, %s113
      %s115 = sphi 0, %s113
      %s116 = sphi 0, %s115
      %s130 = sphi 0, %s116
      %s134 = sphi 0, %s134
      %s136 = sphi 0, %s134
      %s137 = sphi 0, %s136
      %s151 = sphi 0, %s137
      %s155 = sphi 0, %s155
      %s157 = sphi 0, %s155
      %s158 = sphi 0, %s157
      %s172 = sphi 0, %s158
      %s176 = sphi 0, %s176
      %s178 = sphi 0, %s176
      %s179 = sphi 0, %s178
      %s193 = sphi 0, %s179
      %s201 = sphi 0, %s203
      %s204 = sphi 0, %s201
      %s205 = sphi 0, %s204
      %s221 = sphi 0, %s205
    $region4: #{dino_head_forward.2} parent=1 // loop_header_branch
      %19 = sbr.rel (%p17) target = $region8
    $region5: #{dino_head_forward.2} parent=1 // loop_body
      %s21 = ssub.s32 %s16, 1
      %s22 = ssub.s32 %s16, 2
      %s32 = sadd.s32 1, %s25
      %p33 = scmp.ge.s32.totalorder %s32, 1
      %s34 = scalar_select %p33, 0, %s32
      %s35 = sadd.s32 1, %s24
      %s36 = scalar_select %p33, %s35, %s24
      %p37 = scmp.ge.s32.totalorder %s36, 2
      %s38 = scalar_select %p37, 0, %s36
      %s39 = sadd.s32 1, %s23
      %s40 = scalar_select %p37, %s39, %s23
      %p41 = scmp.ge.s32.totalorder %s40, 2
      %s42 = scalar_select %p41, 0, %s40
      %s43 = ssub.s32 %s23, %s42
      %s44 = ssub.s32 %s25, %s34
      %s45 = sor.u32 %s43, %s44
      %p46 = scmp.eq.s32.totalorder %s45, 0
      %s48 = sadd.s32 %s47, 1
      %s49 = scalar_select %p46, %s47, %s48
      %p52 = pneg %p46
      %p53 = scmp.eq.s32.totalorder %s16, 3
      %p54 = por %p52, %p53
      %p55 = scmp.ne.s32.totalorder %s47, %s50
      %p56 = scmp.eq.s32.totalorder %s16, 0
      %p57 = por %p55, %p56
      %p58 = scmp.ne.s32.totalorder %s47, %s50
      %p59 = scmp.eq.s32.totalorder %s21, 3
      %p60 = por %p58, %p59
      %p61 = scmp.ne.s32.totalorder %s50, %s51
      %p62 = scmp.eq.s32.totalorder %s21, 0
      %p63 = por %p61, %p62
      %p64 = scmp.ne.s32.totalorder %s50, %s51
      %p65 = scmp.eq.s32.totalorder %s22, 3
      %p66 = por %p64, %p65
      %p68 = scmp.ne.s32.totalorder %s51, %s67
      %p69 = scmp.eq.s32.totalorder %s22, 0
      %p70 = por %p68, %p69
      %s72 = sadd.s32 %s71, 1
      %p75 = scmp.eq.s32.totalorder %s16, 3
      %p76 = scmp.ne.s32.totalorder %s71, %s73
      %p77 = scmp.eq.s32.totalorder %s16, 0
      %p78 = por %p76, %p77
      %p79 = scmp.ne.s32.totalorder %s71, %s73
      %p80 = scmp.eq.s32.totalorder %s21, 3
      %p81 = por %p79, %p80
      %p82 = scmp.ne.s32.totalorder %s73, %s74
      %p83 = scmp.eq.s32.totalorder %s21, 0
      %p84 = por %p82, %p83
      %p85 = scmp.ne.s32.totalorder %s73, %s74
      %p86 = scmp.eq.s32.totalorder %s22, 3
      %p87 = por %p85, %p86
      %p89 = scmp.ne.s32.totalorder %s74, %s88
      %p90 = scmp.eq.s32.totalorder %s22, 0
      %p91 = por %p89, %p90
      %s93 = sadd.s32 %s92, 1
      %p96 = scmp.eq.s32.totalorder %s16, 3
      %p97 = scmp.ne.s32.totalorder %s92, %s94
      %p98 = scmp.eq.s32.totalorder %s16, 0
      %p99 = por %p97, %p98
      %p100 = scmp.ne.s32.totalorder %s92, %s94
      %p101 = scmp.eq.s32.totalorder %s21, 3
      %p102 = por %p100, %p101
      %p103 = scmp.ne.s32.totalorder %s94, %s95
      %p104 = scmp.eq.s32.totalorder %s21, 0
      %p105 = por %p103, %p104
      %p106 = scmp.ne.s32.totalorder %s94, %s95
      %p107 = scmp.eq.s32.totalorder %s22, 3
      %p108 = por %p106, %p107
      %p110 = scmp.ne.s32.totalorder %s95, %s109
      %p111 = scmp.eq.s32.totalorder %s22, 0
      %p112 = por %p110, %p111
      %s114 = sadd.s32 %s113, 1
      %p117 = scmp.eq.s32.totalorder %s16, 3
      %p118 = scmp.ne.s32.totalorder %s113, %s115
      %p119 = scmp.eq.s32.totalorder %s16, 0
      %p120 = por %p118, %p119
      %p121 = scmp.ne.s32.totalorder %s113, %s115
      %p122 = scmp.eq.s32.totalorder %s21, 3
      %p123 = por %p121, %p122
      %p124 = scmp.ne.s32.totalorder %s115, %s116
      %p125 = scmp.eq.s32.totalorder %s21, 0
      %p126 = por %p124, %p125
      %p127 = scmp.ne.s32.totalorder %s115, %s116
      %p128 = scmp.eq.s32.totalorder %s22, 3
      %p129 = por %p127, %p128
      %p131 = scmp.ne.s32.totalorder %s116, %s130
      %p132 = scmp.eq.s32.totalorder %s22, 0
      %p133 = por %p131, %p132
      %s135 = sadd.s32 %s134, 1
      %p138 = scmp.eq.s32.totalorder %s16, 3
      %p139 = scmp.ne.s32.totalorder %s134, %s136
      %p140 = scmp.eq.s32.totalorder %s16, 0
      %p141 = por %p139, %p140
      %p142 = scmp.ne.s32.totalorder %s134, %s136
      %p143 = scmp.eq.s32.totalorder %s21, 3
      %p144 = por %p142, %p143
      %p145 = scmp.ne.s32.totalorder %s136, %s137
      %p146 = scmp.eq.s32.totalorder %s21, 0
      %p147 = por %p145, %p146
      %p148 = scmp.ne.s32.totalorder %s136, %s137
      %p149 = scmp.eq.s32.totalorder %s22, 3
      %p150 = por %p148, %p149
      %p152 = scmp.ne.s32.totalorder %s137, %s151
      %p153 = scmp.eq.s32.totalorder %s22, 0
      %p154 = por %p152, %p153
      %s156 = sadd.s32 %s155, 1
      %p159 = scmp.eq.s32.totalorder %s16, 3
      %p160 = scmp.ne.s32.totalorder %s155, %s157
      %p161 = scmp.eq.s32.totalorder %s16, 0
      %p162 = por %p160, %p161
      %p163 = scmp.ne.s32.totalorder %s155, %s157
      %p164 = scmp.eq.s32.totalorder %s21, 3
      %p165 = por %p163, %p164
      %p166 = scmp.ne.s32.totalorder %s157, %s158
      %p167 = scmp.eq.s32.totalorder %s21, 0
      %p168 = por %p166, %p167
      %p169 = scmp.ne.s32.totalorder %s157, %s158
      %p170 = scmp.eq.s32.totalorder %s22, 3
      %p171 = por %p169, %p170
      %p173 = scmp.ne.s32.totalorder %s158, %s172
      %p174 = scmp.eq.s32.totalorder %s22, 0
      %p175 = por %p173, %p174
      %s177 = sadd.s32 %s176, 1
      %p180 = scmp.eq.s32.totalorder %s16, 3
      %p181 = scmp.ne.s32.totalorder %s176, %s178
      %p182 = scmp.eq.s32.totalorder %s16, 0
      %p183 = por %p181, %p182
      %p184 = scmp.ne.s32.totalorder %s176, %s178
      %p185 = scmp.eq.s32.totalorder %s21, 3
      %p186 = por %p184, %p185
      %p187 = scmp.ne.s32.totalorder %s178, %s179
      %p188 = scmp.eq.s32.totalorder %s21, 0
      %p189 = por %p187, %p188
      %p190 = scmp.ne.s32.totalorder %s178, %s179
      %p191 = scmp.eq.s32.totalorder %s22, 3
      %p192 = por %p190, %p191
      %p194 = scmp.ne.s32.totalorder %s179, %s193
      %p195 = scmp.eq.s32.totalorder %s22, 0
      %p196 = por %p194, %p195
      %s197 = ssub.s32 %s23, %s42
      %s198 = ssub.s32 %s25, %s34
      %s199 = sor.u32 %s197, %s198
      %p200 = scmp.eq.s32.totalorder %s199, 0
      %s202 = sadd.s32 %s201, 1
      %s203 = scalar_select %p200, %s201, %s202
      %p206 = pneg %p200
      %p207 = scmp.eq.s32.totalorder %s16, 3
      %p208 = por %p206, %p207
      %p209 = scmp.ne.s32.totalorder %s201, %s204
      %p210 = scmp.eq.s32.totalorder %s16, 0
      %p211 = por %p209, %p210
      %p212 = scmp.ne.s32.totalorder %s201, %s204
      %p213 = scmp.eq.s32.totalorder %s21, 3
      %p214 = por %p212, %p213
      %p215 = scmp.ne.s32.totalorder %s204, %s205
      %p216 = scmp.eq.s32.totalorder %s21, 0
      %p217 = por %p215, %p216
      %p218 = scmp.ne.s32.totalorder %s204, %s205
      %p219 = scmp.eq.s32.totalorder %s22, 3
      %p220 = por %p218, %p219
      %p222 = scmp.ne.s32.totalorder %s205, %s221
      %p223 = scmp.eq.s32.totalorder %s22, 0
      %p224 = por %p222, %p223
      %p225 = scmp.le.s32.totalorder 1, %s16
      %p226 = scmp.lt.s32.totalorder %s16, 5
      %p227 = pnand %p225, %p226
      %p228 = pneg %p227
      // Predicated region
      $region9: #{dino_head_forward.2} parent=5 // pred_check
        _
      $region10: #{dino_head_forward.2} parent=5 // pred_check_branch
        %230 = sbr.rel (%p227) target = $region12
      $region11: #{dino_head_forward.2} parent=5 // pred_region
        %s231 = ssub.s32 %s16, 1
        // Predicated region
        $region13: #{dino_head_forward.2} parent=11 // pred_check
          %p232 = pneg %p84
        $region14: #{dino_head_forward.2} parent=11 // pred_check_branch
          %234 = sbr.rel (%p232) target = $region16
        $region15: #{dino_head_forward.2} parent=11 // pred_region
          _
        $region16: #{dino_head_forward.2} parent=11 // pred_fallthru
          _
        // Predicated region
        $region17: #{dino_head_forward.2} parent=11 // pred_check
          %p235 = pneg %p105
        $region18: #{dino_head_forward.2} parent=11 // pred_check_branch
          %237 = sbr.rel (%p235) target = $region20
        $region19: #{dino_head_forward.2} parent=11 // pred_region
          _
        $region20: #{dino_head_forward.2} parent=11 // pred_fallthru
          _
        // Predicated region
        $region21: #{dino_head_forward.2} parent=11 // pred_check
          %p238 = pneg %p126
        $region22: #{dino_head_forward.2} parent=11 // pred_check_branch
          %240 = sbr.rel (%p238) target = $region24
        $region23: #{dino_head_forward.2} parent=11 // pred_region
          _
        $region24: #{dino_head_forward.2} parent=11 // pred_fallthru
          _
        // Predicated region
        $region25: #{dino_head_forward.2} parent=11 // pred_check
          %p241 = pneg %p147
        $region26: #{dino_head_forward.2} parent=11 // pred_check_branch
          %243 = sbr.rel (%p241) target = $region28
        $region27: #{dino_head_forward.2} parent=11 // pred_region
          _
        $region28: #{dino_head_forward.2} parent=11 // pred_fallthru
          _
        // Predicated region
        $region29: #{dino_head_forward.2} parent=11 // pred_check
          %p244 = pneg %p168
        $region30: #{dino_head_forward.2} parent=11 // pred_check_branch
          %246 = sbr.rel (%p244) target = $region32
        $region31: #{dino_head_forward.2} parent=11 // pred_region
          _
        $region32: #{dino_head_forward.2} parent=11 // pred_fallthru
          _
        // Predicated region
        $region33: #{dino_head_forward.2} parent=11 // pred_check
          %p247 = pneg %p189
        $region34: #{dino_head_forward.2} parent=11 // pred_check_branch
          %249 = sbr.rel (%p247) target = $region36
        $region35: #{dino_head_forward.2} parent=11 // pred_region
          _
        $region36: #{dino_head_forward.2} parent=11 // pred_fallthru
          _
      $region12: #{dino_head_forward.2} parent=5 // pred_fallthru
        _
      %p250 = scmp.lt.s32.totalorder %s16, 4
      // Predicated region
      $region37: #{dino_head_forward.2} parent=5 // pred_check
        %p251 = pneg %p250
      $region38: #{dino_head_forward.2} parent=5 // pred_check_branch
        %253 = sbr.rel (%p251) target = $region40
      $region39: #{dino_head_forward.2} parent=5 // pred_region
        // Predicated region
        $region41: #{dino_head_forward.2} parent=39 // pred_check
          %p254 = pneg %p57
        $region42: #{dino_head_forward.2} parent=39 // pred_check_branch
          %256 = sbr.rel (%p254) target = $region44
        $region43: #{dino_head_forward.2} parent=39 // pred_region
          %s257 = sand.u32 %s47, 1
          %s258 = scalar_lea.sflag [#allocation4], %s257
          %s259 = sand.u32 %s47, 1
          %s260 = smul.addr %s259, 256
          %s261 = scalar_lea.vmem [#allocation3], %s260
          %s262 = smul.u32 32, %s25
          %s264 = ssub.s32 4096, 4096
          %265 = vsyncadd %s258, %s264
          %s266 = smul.addr %s23, 32
          %s267 = sadd.s32 %s262, %s266
          %s268 = smul.addr %s267, 128
          %s269 = scalar_lea.hbm %s0, %s268
          %s270 = sshll.u32 %s261, 4
          %s271 = int_to_ptr.vmem [resolvable:$true] %s270
          %276 = dma.hbm_to_vmem [thread:$0]  %s269, 4096, %s271, %s258, 128, 128, 8
        $region44: #{dino_head_forward.2} parent=39 // pred_fallthru
          _
      $region40: #{dino_head_forward.2} parent=5 // pred_fallthru
        _
      %p277 = scmp.le.s32.totalorder 1, %s16
      %p278 = scmp.lt.s32.totalorder %s16, 5
      %p279 = pnand %p277, %p278
      %p280 = pneg %p279
      // Predicated region
      $region45: #{dino_head_forward.2} parent=5 // pred_check
        _
      $region46: #{dino_head_forward.2} parent=5 // pred_check_branch
        %282 = sbr.rel (%p279) target = $region48
      $region47: #{dino_head_forward.2} parent=5 // pred_region
        %s283 = ssub.s32 %s16, 1
        %s284 = sand.u32 %s50, 1
        %s285 = scalar_lea.sflag [#allocation4], %s284
        %s286 = sand.u32 %s50, 1
        %s287 = smul.addr %s286, 256
        %s288 = scalar_lea.vmem [#allocation3], %s287
        // Predicated region
        $region49: #{dino_head_forward.2} parent=47 // pred_check
          %p289 = pneg %p63
        $region50: #{dino_head_forward.2} parent=47 // pred_check_branch
          %291 = sbr.rel (%p289) target = $region52
        $region51: #{dino_head_forward.2} parent=47 // pred_region
          %292 = dma.done %s285, 4096
        $region52: #{dino_head_forward.2} parent=47 // pred_fallthru
          _
        %s293 = sand.u32 %s50, 1
        %s294 = scalar_lea.sflag [#allocation4], %s293
        %s295 = sand.u32 %s50, 1
        %s296 = smul.addr %s295, 256
        %s297 = scalar_lea.vmem [#allocation3], %s296
        %p298 = pneg %p63
        %p299 = pneg %p60
        %p300 = pneg %p84
        %p301 = pneg %p81
        %p302 = pneg %p105
        %p303 = pneg %p102
        %p304 = pneg %p126
        %p305 = pneg %p123
        %p306 = pneg %p147
        %p307 = pneg %p144
        %p308 = pneg %p168
        %p309 = pneg %p165
        %p310 = pneg %p189
        %p311 = pneg %p186
        %p312 = pneg %p217
        %p313 = pneg %p214
        %s314 = smul.u32 32, %s28
        %p315 = scmp.lt.s32.totalorder %s26, 1
        %s316 = scalar_select %p315, %s26, 1
        %p317 = scmp.lt.s32.totalorder %s314, 31
        %s318 = scalar_select %p317, %s314, 31
        %s319 = smul.addr %s316, 32
        %s320 = sadd.s32 %s318, %s319
        %s321 = smul.addr %s320, 8
        %s322 = scalar_lea.vmem %s7, %s321
        %s323 = smul.u32 32, %s28
        %s324 = smul.u32 32, %s28
        %p325 = scmp.lt.s32.totalorder %s26, 1
        %s326 = scalar_select %p325, %s26, 1
        %p327 = scmp.lt.s32.totalorder %s324, 31
        %s328 = scalar_select %p327, %s324, 31
        %s329 = smul.addr %s326, 32
        %s330 = sadd.s32 %s328, %s329
        %s331 = smul.addr %s330, 8
        %s332 = scalar_lea.vmem %s7, %s331
        %s333 = smul.u32 32, %s28
        %v335 = vld [vmem:[%s288] sm:$0xff]
        %v336 = vld [vmem:[%s288 + $0x8] sm:$0xff]
        %v337 = vld [vmem:[%s288 + $0x10] sm:$0xff]
        %v338 = vld [vmem:[%s288 + $0x18] sm:$0xff]
        %v339 = vld [vmem:[%s288 + $0x20] sm:$0xff]
        %v340 = vld [vmem:[%s288 + $0x28] sm:$0xff]
        %v341 = vld [vmem:[%s288 + $0x30] sm:$0xff]
        %v342 = vld [vmem:[%s288 + $0x38] sm:$0xff]
        %v343 = vld [vmem:[%s288 + $0x40] sm:$0xff]
        %v344 = vld [vmem:[%s288 + $0x48] sm:$0xff]
        %v345 = vld [vmem:[%s288 + $0x50] sm:$0xff]
        %v346 = vld [vmem:[%s288 + $0x58] sm:$0xff]
        %v347 = vld [vmem:[%s288 + $0x60] sm:$0xff]
        %v348 = vld [vmem:[%s288 + $0x68] sm:$0xff]
        %v349 = vld [vmem:[%s288 + $0x70] sm:$0xff]
        %v350 = vld [vmem:[%s288 + $0x78] sm:$0xff]
        %v351 = vld [vmem:[%s288 + $0x80] sm:$0xff]
        %v352 = vld [vmem:[%s288 + $0x88] sm:$0xff]
        %v353 = vld [vmem:[%s288 + $0x90] sm:$0xff]
        %v354 = vld [vmem:[%s288 + $0x98] sm:$0xff]
        %v355 = vld [vmem:[%s288 + $0xa0] sm:$0xff]
        %v356 = vld [vmem:[%s288 + $0xa8] sm:$0xff]
        %v357 = vld [vmem:[%s288 + $0xb0] sm:$0xff]
        %v358 = vld [vmem:[%s288 + $0xb8] sm:$0xff]
        %v359 = vld [vmem:[%s288 + $0xc0] sm:$0xff]
        %v360 = vld [vmem:[%s288 + $0xc8] sm:$0xff]
        %v361 = vld [vmem:[%s288 + $0xd0] sm:$0xff]
        %v362 = vld [vmem:[%s288 + $0xd8] sm:$0xff]
        %v363 = vld [vmem:[%s288 + $0xe0] sm:$0xff]
        %v364 = vld [vmem:[%s288 + $0xe8] sm:$0xff]
        %v365 = vld [vmem:[%s288 + $0xf0] sm:$0xff]
        %v366 = vld [vmem:[%s288 + $0xf8] sm:$0xff]
        %v367 = vpack.c.bf16 %v336, %v335
        %v368 = vpack.c.bf16 %v338, %v337
        %v369 = vpack.c.bf16 %v340, %v339
        %v370 = vpack.c.bf16 %v342, %v341
        %v371 = vpack.c.bf16 %v344, %v343
        %v372 = vpack.c.bf16 %v346, %v345
        %v373 = vpack.c.bf16 %v348, %v347
        %v374 = vpack.c.bf16 %v350, %v349
        %v375 = vpack.c.bf16 %v352, %v351
        %v376 = vpack.c.bf16 %v354, %v353
        %v377 = vpack.c.bf16 %v356, %v355
        %v378 = vpack.c.bf16 %v358, %v357
        %v379 = vpack.c.bf16 %v360, %v359
        %v380 = vpack.c.bf16 %v362, %v361
        %v381 = vpack.c.bf16 %v364, %v363
        %v382 = vpack.c.bf16 %v366, %v365
        %v383 = vld [vmem:[%s1] sm:$0xf]
        %v384 = vld [vmem:[%s1 + $0x4] sm:$0xf]
        %v385 = vld [vmem:[%s1 + $0x8] sm:$0xf]
        %v386 = vld [vmem:[%s1 + $0xc] sm:$0xf]
        %v387 = vld [vmem:[%s1 + $0x10] sm:$0xf]
        %v388 = vld [vmem:[%s1 + $0x14] sm:$0xf]
        %v389 = vld [vmem:[%s1 + $0x18] sm:$0xf]
        %v390 = vld [vmem:[%s1 + $0x1c] sm:$0xf]
        %v391 = vld [vmem:[%s2] sm:$0x1]
        %v393 = vlaneseq
        %v394 = vshrl.u32 %v393, 7
        %v395 = vsub.s32 0, %v394
        %v396 = vrot.slane %v391, %v395
        %v406 = vunpack.c.l.b16 %v383
        %v407 = vunpack.c.l.b16 %v384
        %v408 = vunpack.c.l.b16 %v385
        %v409 = vunpack.c.l.b16 %v386
        %v410 = vunpack.c.l.b16 %v387
        %v411 = vunpack.c.l.b16 %v388
        %v412 = vunpack.c.l.b16 %v389
        %v413 = vunpack.c.l.b16 %v390
        %v414 = vpack.c.b16 %v407, %v406
        %v415 = vpack.c.b16 %v409, %v408
        %v416 = vpack.c.b16 %v411, %v410
        %v417 = vpack.c.b16 %v413, %v412
        %vm422 = vcmask 523264
        %v424 = vsel %vm422, %v367, 0
        %v427 = vsel %vm422, %v368, 0
        %v430 = vsel %vm422, %v369, 0
        %v433 = vsel %vm422, %v370, 0
        %v436 = vsel %vm422, %v371, 0
        %v439 = vsel %vm422, %v372, 0
        %v442 = vsel %vm422, %v373, 0
        %v445 = vsel %vm422, %v374, 0
        %v448 = vsel %vm422, %v375, 0
        %v451 = vsel %vm422, %v376, 0
        %v454 = vsel %vm422, %v377, 0
        %v457 = vsel %vm422, %v378, 0
        %v460 = vsel %vm422, %v379, 0
        %v463 = vsel %vm422, %v380, 0
        %v466 = vsel %vm422, %v381, 0
        %v469 = vsel %vm422, %v382, 0
        %471 = vmatprep.subr.bf16.mxu0 0
        %472 = vmatpush1.bf16.msra.mxu0 %v414
        %473 = vmatprep.subr.bf16.mxu0 0
        %474 = vmatpush1.bf16.msra.mxu0 %v415
        %475 = vmatprep.subr.bf16.mxu0 0
        %476 = vmatpush1.bf16.msra.mxu0 %v416
        %477 = vmatprep.subr.bf16.mxu0 0
        %478 = vmatpush1.bf16.msra.mxu0 %v417
        %479 = vmatprep.subr.bf16.mxu0 0
        %480 = vmatpush1.bf16.msra.mxu0 0
        %481 = vmatprep.subr.bf16.mxu0 0
        %482 = vmatpush1.bf16.msra.mxu0 0
        %483 = vmatprep.subr.bf16.mxu0 0
        %484 = vmatpush1.bf16.msra.mxu0 0
        %485 = vmatprep.subr.bf16.mxu0 0
        %486 = vmatpush1.bf16.msra.mxu0 0
        %487 = vmatprep.subr.bf16.mxu0 0
        %488 = vmatpush1.bf16.msra.mxu0 0
        %489 = vmatprep.subr.bf16.mxu0 0
        %490 = vmatpush1.bf16.msra.mxu0 0
        %491 = vmatprep.subr.bf16.mxu0 0
        %492 = vmatpush1.bf16.msra.mxu0 0
        %493 = vmatprep.subr.bf16.mxu0 0
        %494 = vmatpush1.bf16.msra.mxu0 0
        %495 = vmatprep.subr.bf16.mxu0 0
        %496 = vmatpush1.bf16.msra.mxu0 0
        %497 = vmatprep.subr.bf16.mxu0 0
        %498 = vmatpush1.bf16.msra.mxu0 0
        %499 = vmatprep.subr.bf16.mxu0 0
        %500 = vmatpush1.bf16.msra.mxu0 0
        %501 = vmatprep.subr.bf16.mxu0 0
        %502 = vmatpush1.bf16.msra.mxu0 0
        %503 = vmatprep.mubr.bf16.mxu0 0
        %504 = vmatmul.mubr.bf16.gmra.mrb[0].mxu0 %v424
        %v505 = vpop.f32.mrb[0].mxu0
        %v506 = vadd.f32 %v396, %v505
        %v507 = vpop.f32.mrb[0].mxu0
        %v508 = vpop.f32.mrb[0].mxu0
        %v509 = vadd.f32 %v396, %v508
        %v510 = vpop.f32.mrb[0].mxu0
        %511 = vmatprep.mubr.bf16.mxu0 0
        %512 = vmatmul.mubr.bf16.gmra.mrb[0].mxu0 %v427
        %v513 = vpop.f32.mrb[0].mxu0
        %v514 = vadd.f32 %v396, %v513
        %v515 = vpop.f32.mrb[0].mxu0
        %v516 = vpop.f32.mrb[0].mxu0
        %v517 = vadd.f32 %v396, %v516
        %v518 = vpop.f32.mrb[0].mxu0
        %519 = vmatprep.mubr.bf16.mxu0 0
        %520 = vmatmul.mubr.bf16.gmra.mrb[0].mxu0 %v430
        %v521 = vpop.f32.mrb[0].mxu0
        %v522 = vadd.f32 %v396, %v521
        %v523 = vpop.f32.mrb[0].mxu0
        %v524 = vpop.f32.mrb[0].mxu0
        %v525 = vadd.f32 %v396, %v524
        %v526 = vpop.f32.mrb[0].mxu0
        %527 = vmatprep.mubr.bf16.mxu0 0
        %528 = vmatmul.mubr.bf16.gmra.mrb[0].mxu0 %v433
        %v529 = vpop.f32.mrb[0].mxu0
        %v530 = vadd.f32 %v396, %v529
        %v531 = vpop.f32.mrb[0].mxu0
        %v532 = vpop.f32.mrb[0].mxu0
        %v533 = vadd.f32 %v396, %v532
        %v534 = vpop.f32.mrb[0].mxu0
        %535 = vmatprep.mubr.bf16.mxu0 0
        %536 = vmatmul.mubr.bf16.gmra.mrb[0].mxu0 %v436
        %v537 = vpop.f32.mrb[0].mxu0
        %v538 = vadd.f32 %v396, %v537
        %v539 = vpop.f32.mrb[0].mxu0
        %v540 = vpop.f32.mrb[0].mxu0
        %v541 = vadd.f32 %v396, %v540
        %v542 = vpop.f32.mrb[0].mxu0
        %543 = vmatprep.mubr.bf16.mxu0 0
        %544 = vmatmul.mubr.bf16.gmra.mrb[0].mxu0 %v439
        %v545 = vpop.f32.mrb[0].mxu0
        %v546 = vadd.f32 %v396, %v545
        %v547 = vpop.f32.mrb[0].mxu0
        %v548 = vpop.f32.mrb[0].mxu0
        %v549 = vadd.f32 %v396, %v548
        %v550 = vpop.f32.mrb[0].mxu0
        %551 = vmatprep.mubr.bf16.mxu0 0
        %552 = vmatmul.mubr.bf16.gmra.mrb[0].mxu0 %v442
        %v553 = vpop.f32.mrb[0].mxu0
        %v554 = vadd.f32 %v396, %v553
        %v555 = vpop.f32.mrb[0].mxu0
        %v556 = vpop.f32.mrb[0].mxu0
        %v557 = vadd.f32 %v396, %v556
        %v558 = vpop.f32.mrb[0].mxu0
        %559 = vmatprep.mubr.bf16.mxu0 0
        %560 = vmatmul.mubr.bf16.gmra.mrb[0].mxu0 %v445
        %v561 = vpop.f32.mrb[0].mxu0
        %v562 = vadd.f32 %v396, %v561
        %v563 = vpop.f32.mrb[0].mxu0
        %v564 = vpop.f32.mrb[0].mxu0
        %v565 = vadd.f32 %v396, %v564
        %v566 = vpop.f32.mrb[0].mxu0
        %567 = vmatprep.mubr.bf16.mxu0 0
        %568 = vmatmul.mubr.bf16.gmra.mrb[0].mxu0 %v448
        %v569 = vpop.f32.mrb[0].mxu0
        %v570 = vadd.f32 %v396, %v569
        %v571 = vpop.f32.mrb[0].mxu0
        %v572 = vpop.f32.mrb[0].mxu0
        %v573 = vadd.f32 %v396, %v572
        %v574 = vpop.f32.mrb[0].mxu0
        %575 = vmatprep.mubr.bf16.mxu0 0
        %576 = vmatmul.mubr.bf16.gmra.mrb[0].mxu0 %v451
        %v577 = vpop.f32.mrb[0].mxu0
        %v578 = vadd.f32 %v396, %v577
        %v579 = vpop.f32.mrb[0].mxu0
        %v580 = vpop.f32.mrb[0].mxu0
        %v581 = vadd.f32 %v396, %v580
        %v582 = vpop.f32.mrb[0].mxu0
        %583 = vmatprep.mubr.bf16.mxu0 0
        %584 = vmatmul.mubr.bf16.gmra.mrb[0].mxu0 %v454
        %v585 = vpop.f32.mrb[0].mxu0
        %v586 = vadd.f32 %v396, %v585
        %v587 = vpop.f32.mrb[0].mxu0
        %v588 = vpop.f32.mrb[0].mxu0
        %v589 = vadd.f32 %v396, %v588
        %v590 = vpop.f32.mrb[0].mxu0
        %591 = vmatprep.mubr.bf16.mxu0 0
        %592 = vmatmul.mubr.bf16.gmra.mrb[0].mxu0 %v457
        %v593 = vpop.f32.mrb[0].mxu0
        %v594 = vadd.f32 %v396, %v593
        %v595 = vpop.f32.mrb[0].mxu0
        %v596 = vpop.f32.mrb[0].mxu0
        %v597 = vadd.f32 %v396, %v596
        %v598 = vpop.f32.mrb[0].mxu0
        %599 = vmatprep.mubr.bf16.mxu0 0
        %600 = vmatmul.mubr.bf16.gmra.mrb[0].mxu0 %v460
        %v601 = vpop.f32.mrb[0].mxu0
        %v602 = vadd.f32 %v396, %v601
        %v603 = vpop.f32.mrb[0].mxu0
        %v604 = vpop.f32.mrb[0].mxu0
        %v605 = vadd.f32 %v396, %v604
        %v606 = vpop.f32.mrb[0].mxu0
        %607 = vmatprep.mubr.bf16.mxu0 0
        %608 = vmatmul.mubr.bf16.gmra.mrb[0].mxu0 %v463
        %v609 = vpop.f32.mrb[0].mxu0
        %v610 = vadd.f32 %v396, %v609
        %v611 = vpop.f32.mrb[0].mxu0
        %v612 = vpop.f32.mrb[0].mxu0
        %v613 = vadd.f32 %v396, %v612
        %v614 = vpop.f32.mrb[0].mxu0
        %615 = vmatprep.mubr.bf16.mxu0 0
        %616 = vmatmul.mubr.bf16.gmra.mrb[0].mxu0 %v466
        %v617 = vpop.f32.mrb[0].mxu0
        %v618 = vadd.f32 %v396, %v617
        %v619 = vpop.f32.mrb[0].mxu0
        %v620 = vpop.f32.mrb[0].mxu0
        %v621 = vadd.f32 %v396, %v620
        %v622 = vpop.f32.mrb[0].mxu0
        %623 = vmatprep.mubr.bf16.mxu0 0
        %624 = vmatmul.mubr.bf16.gmra.mrb[0].mxu0 %v469
        %v625 = vpop.f32.mrb[0].mxu0
        %v626 = vadd.f32 %v396, %v625
        %v627 = vpop.f32.mrb[0].mxu0
        %v628 = vpop.f32.mrb[0].mxu0
        %v629 = vadd.f32 %v396, %v628
        %v630 = vpop.f32.mrb[0].mxu0
        %631 = vdwg.mxu0
        %p632 = scmp.eq.s32.totalorder %s27, 0
        %p633 = scmp.eq.s32.totalorder %s28, 0
        %p634 = pnand %p632, %p633
        %p635 = pneg %p634
        // Predicated region
        $region53: #{dino_head_forward.2} parent=47 // pred_check
          _
        $region54: #{dino_head_forward.2} parent=47 // pred_check_branch
          %637 = sbr.rel (%p634) target = $region56
        $region55: #{dino_head_forward.2} parent=47 // pred_region
          %638 = vst [vmem:[#allocation2] sm:$0x3] 0.0
        $region56: #{dino_head_forward.2} parent=47 // pred_fallthru
          _
        // Predicated region
        $region57: #{dino_head_forward.2} parent=47 // pred_check
          %p639 = pneg %p632
        $region58: #{dino_head_forward.2} parent=47 // pred_check_branch
          %641 = sbr.rel (%p639) target = $region60
        $region59: #{dino_head_forward.2} parent=47 // pred_region
          %v642 = vadd.f32 %v506, %v509
          %v643 = vadd.f32 %v642, %v514
          %v644 = vadd.f32 %v643, %v517
          %v645 = vadd.f32 %v644, %v522
          %v646 = vadd.f32 %v645, %v525
          %v647 = vadd.f32 %v646, %v530
          %v648 = vadd.f32 %v647, %v533
          %v649 = vadd.f32 %v648, %v538
          %v650 = vadd.f32 %v649, %v541
          %v651 = vadd.f32 %v650, %v546
          %v652 = vadd.f32 %v651, %v549
          %v653 = vadd.f32 %v652, %v554
          %v654 = vadd.f32 %v653, %v557
          %v655 = vadd.f32 %v654, %v562
          %v656 = vadd.f32 %v655, %v565
          %v657 = vadd.f32 %v656, %v570
          %v658 = vadd.f32 %v657, %v573
          %v659 = vadd.f32 %v658, %v578
          %v660 = vadd.f32 %v659, %v581
          %v661 = vadd.f32 %v660, %v586
          %v662 = vadd.f32 %v661, %v589
          %v663 = vadd.f32 %v662, %v594
          %v664 = vadd.f32 %v663, %v597
          %v665 = vadd.f32 %v664, %v602
          %v666 = vadd.f32 %v665, %v605
          %v667 = vadd.f32 %v666, %v610
          %v668 = vadd.f32 %v667, %v613
          %v669 = vadd.f32 %v668, %v618
          %v670 = vadd.f32 %v669, %v621
          %v671 = vadd.f32 %v670, %v626
          %v672 = vadd.f32 %v671, %v629
          %v673 = vrot.slane %v672, 4
          %v674 = vadd.f32 %v672, %v673
          %v675 = vrot.slane %v674, 2
          %v676 = vadd.f32 %v674, %v675
          %v677 = vrot.slane %v676, 1
          %v678 = vadd.f32 %v676, %v677
          %v679 = vmul.f32 %v506, %v506
          %v680 = vmul.f32 %v509, %v509
          %v681 = vmul.f32 %v514, %v514
          %v682 = vmul.f32 %v517, %v517
          %v683 = vmul.f32 %v522, %v522
          %v684 = vmul.f32 %v525, %v525
          %v685 = vmul.f32 %v530, %v530
          %v686 = vmul.f32 %v533, %v533
          %v687 = vmul.f32 %v538, %v538
          %v688 = vmul.f32 %v541, %v541
          %v689 = vmul.f32 %v546, %v546
          %v690 = vmul.f32 %v549, %v549
          %v691 = vmul.f32 %v554, %v554
          %v692 = vmul.f32 %v557, %v557
          %v693 = vmul.f32 %v562, %v562
          %v694 = vmul.f32 %v565, %v565
          %v695 = vmul.f32 %v570, %v570
          %v696 = vmul.f32 %v573, %v573
          %v697 = vmul.f32 %v578, %v578
          %v698 = vmul.f32 %v581, %v581
          %v699 = vmul.f32 %v586, %v586
          %v700 = vmul.f32 %v589, %v589
          %v701 = vmul.f32 %v594, %v594
          %v702 = vmul.f32 %v597, %v597
          %v703 = vmul.f32 %v602, %v602
          %v704 = vmul.f32 %v605, %v605
          %v705 = vmul.f32 %v610, %v610
          %v706 = vmul.f32 %v613, %v613
          %v707 = vmul.f32 %v618, %v618
          %v708 = vmul.f32 %v621, %v621
          %v709 = vmul.f32 %v626, %v626
          %v710 = vmul.f32 %v629, %v629
          %v711 = vadd.f32 %v679, %v680
          %v712 = vadd.f32 %v711, %v681
          %v713 = vadd.f32 %v712, %v682
          %v714 = vadd.f32 %v713, %v683
          %v715 = vadd.f32 %v714, %v684
          %v716 = vadd.f32 %v715, %v685
          %v717 = vadd.f32 %v716, %v686
          %v718 = vadd.f32 %v717, %v687
          %v719 = vadd.f32 %v718, %v688
          %v720 = vadd.f32 %v719, %v689
          %v721 = vadd.f32 %v720, %v690
          %v722 = vadd.f32 %v721, %v691
          %v723 = vadd.f32 %v722, %v692
          %v724 = vadd.f32 %v723, %v693
          %v725 = vadd.f32 %v724, %v694
          %v726 = vadd.f32 %v725, %v695
          %v727 = vadd.f32 %v726, %v696
          %v728 = vadd.f32 %v727, %v697
          %v729 = vadd.f32 %v728, %v698
          %v730 = vadd.f32 %v729, %v699
          %v731 = vadd.f32 %v730, %v700
          %v732 = vadd.f32 %v731, %v701
          %v733 = vadd.f32 %v732, %v702
          %v734 = vadd.f32 %v733, %v703
          %v735 = vadd.f32 %v734, %v704
          %v736 = vadd.f32 %v735, %v705
          %v737 = vadd.f32 %v736, %v706
          %v738 = vadd.f32 %v737, %v707
          %v739 = vadd.f32 %v738, %v708
          %v740 = vadd.f32 %v739, %v709
          %v741 = vadd.f32 %v740, %v710
          %v742 = vrot.slane %v741, 4
          %v743 = vadd.f32 %v741, %v742
          %v744 = vrot.slane %v743, 2
          %v745 = vadd.f32 %v743, %v744
          %v746 = vrot.slane %v745, 1
          %v747 = vadd.f32 %v745, %v746
          %vm748 = vcmask 1040384
          %v749 = vsel %vm748, %v678, %v747
          %v750 = vld [vmem:[#allocation2] sm:$0x3]
          %v751 = vadd.f32 %v750, %v749
          %752 = vst [vmem:[#allocation2] sm:$0x3] %v751
        $region60: #{dino_head_forward.2} parent=47 // pred_fallthru
          _
        %p753 = scmp.eq.s32.totalorder %s27, 1
        // Predicated region
        $region61: #{dino_head_forward.2} parent=47 // pred_check
          %p754 = pneg %p753
        $region62: #{dino_head_forward.2} parent=47 // pred_check_branch
          %756 = sbr.rel (%p754) target = $region64
        $region63: #{dino_head_forward.2} parent=47 // pred_region
          %v757 = vld [vmem:[#allocation2] sm:$0x3]
          %v758 = vld [vmem:[%s5] sm:$0xff]
          %v759 = vld [vmem:[%s5 + $0x8] sm:$0xff]
          %v760 = vld [vmem:[%s5 + $0x10] sm:$0xff]
          %v761 = vld [vmem:[%s5 + $0x18] sm:$0xff]
          %v762 = vld [vmem:[%s5 + $0x20] sm:$0xff]
          %v763 = vld [vmem:[%s5 + $0x28] sm:$0xff]
          %v764 = vld [vmem:[%s5 + $0x30] sm:$0xff]
          %v765 = vld [vmem:[%s5 + $0x38] sm:$0xff]
          %v766 = vld [vmem:[%s5 + $0x40] sm:$0xff]
          %v767 = vld [vmem:[%s5 + $0x48] sm:$0xff]
          %v768 = vld [vmem:[%s5 + $0x50] sm:$0xff]
          %v769 = vld [vmem:[%s5 + $0x58] sm:$0xff]
          %v770 = vld [vmem:[%s5 + $0x60] sm:$0xff]
          %v771 = vld [vmem:[%s5 + $0x68] sm:$0xff]
          %v772 = vld [vmem:[%s5 + $0x70] sm:$0xff]
          %v773 = vld [vmem:[%s5 + $0x78] sm:$0xff]
          %774 = vmatprep.subr.mxu0 0.0
          %775 = vmatpush1.msra.mxu0 %v758
          %776 = vmatprep.subr.mxu0 0.0
          %777 = vmatpush1.msra.mxu0 %v759
          %778 = vmatprep.subr.mxu0 0.0
          %779 = vmatpush1.msra.mxu0 %v760
          %780 = vmatprep.subr.mxu0 0.0
          %781 = vmatpush1.msra.mxu0 %v761
          %782 = vmatprep.subr.mxu0 0.0
          %783 = vmatpush1.msra.mxu0 %v762
          %784 = vmatprep.subr.mxu0 0.0
          %785 = vmatpush1.msra.mxu0 %v763
          %786 = vmatprep.subr.mxu0 0.0
          %787 = vmatpush1.msra.mxu0 %v764
          %788 = vmatprep.subr.mxu0 0.0
          %789 = vmatpush1.msra.mxu0 %v765
          %790 = vmatprep.subr.mxu0 0.0
          %791 = vmatpush1.msra.mxu0 %v766
          %792 = vmatprep.subr.mxu0 0.0
          %793 = vmatpush1.msra.mxu0 %v767
          %794 = vmatprep.subr.mxu0 0.0
          %795 = vmatpush1.msra.mxu0 %v768
          %796 = vmatprep.subr.mxu0 0.0
          %797 = vmatpush1.msra.mxu0 %v769
          %798 = vmatprep.subr.mxu0 0.0
          %799 = vmatpush1.msra.mxu0 %v770
          %800 = vmatprep.subr.mxu0 0.0
          %801 = vmatpush1.msra.mxu0 %v771
          %802 = vmatprep.subr.mxu0 0.0
          %803 = vmatpush1.msra.mxu0 %v772
          %804 = vmatprep.subr.mxu0 0.0
          %805 = vmatpush1.msra.mxu0 %v773
          %806 = vmatprep.subr.mxu0 0.0
          %807 = vmatpush1.msra.mxu0 0.0
          %808 = vmatprep.subr.mxu0 0.0
          %809 = vmatpush1.msra.mxu0 0.0
          %810 = vmatprep.subr.mxu0 0.0
          %811 = vmatpush1.msra.mxu0 0.0
          %812 = vmatprep.subr.mxu0 0.0
          %813 = vmatpush1.msra.mxu0 0.0
          %814 = vmatprep.subr.mxu0 0.0
          %815 = vmatpush1.msra.mxu0 0.0
          %816 = vmatprep.subr.mxu0 0.0
          %817 = vmatpush1.msra.mxu0 0.0
          %818 = vmatprep.subr.mxu0 0.0
          %819 = vmatpush1.msra.mxu0 0.0
          %820 = vmatprep.subr.mxu0 0.0
          %821 = vmatpush1.msra.mxu0 0.0
          %822 = vmatprep.subr.mxu0 0.0
          %823 = vmatpush1.msra.mxu0 0.0
          %824 = vmatprep.subr.mxu0 0.0
          %825 = vmatpush1.msra.mxu0 0.0
          %826 = vmatprep.subr.mxu0 0.0
          %827 = vmatpush1.msra.mxu0 0.0
          %828 = vmatprep.subr.mxu0 0.0
          %829 = vmatpush1.msra.mxu0 0.0
          %830 = vmatprep.subr.mxu0 0.0
          %831 = vmatpush1.msra.mxu0 0.0
          %832 = vmatprep.subr.mxu0 0.0
          %833 = vmatpush1.msra.mxu0 0.0
          %834 = vmatprep.subr.mxu0 0.0
          %835 = vmatpush1.msra.mxu0 0.0
          %836 = vmatprep.subr.mxu0 0.0
          %837 = vmatpush1.msra.mxu0 0.0
          %838 = vmatprep.mubr.f32.mxu0 0.0
          %839 = vmatmul.mubr.f32.gmra.mrb[0].mxu0 %v757
          %v840 = vpop.f32.mrb[0].mxu0
          %v841 = vadd.f32 0.0, %v840
          %v842 = vpop.f32.mrb[0].mxu0
          %843 = vdwg.mxu0
          %v844 = vmul.f32 %v841, 0.0009765625
          %v845 = vld [vmem:[%s6] sm:$0xff]
          %v846 = vld [vmem:[%s6 + $0x8] sm:$0xff]
          %v847 = vld [vmem:[%s6 + $0x10] sm:$0xff]
          %v848 = vld [vmem:[%s6 + $0x18] sm:$0xff]
          %vm849 = vcmask 261120
          %v851 = vsel %vm849, %v844, 0
          %853 = vmatprep.subr.mxu0 0.0
          %854 = vmatpush1.msra.mxu0 %v845
          %855 = vmatprep.subr.mxu0 0.0
          %856 = vmatpush1.msra.mxu0 %v846
          %857 = vmatprep.subr.mxu0 0.0
          %858 = vmatpush1.msra.mxu0 %v847
          %859 = vmatprep.subr.mxu0 0.0
          %860 = vmatpush1.msra.mxu0 %v848
          %861 = vmatprep.subr.mxu0 0.0
          %862 = vmatpush1.msra.mxu0 0.0
          %863 = vmatprep.subr.mxu0 0.0
          %864 = vmatpush1.msra.mxu0 0.0
          %865 = vmatprep.subr.mxu0 0.0
          %866 = vmatpush1.msra.mxu0 0.0
          %867 = vmatprep.subr.mxu0 0.0
          %868 = vmatpush1.msra.mxu0 0.0
          %869 = vmatprep.subr.mxu0 0.0
          %870 = vmatpush1.msra.mxu0 0.0
          %871 = vmatprep.subr.mxu0 0.0
          %872 = vmatpush1.msra.mxu0 0.0
          %873 = vmatprep.subr.mxu0 0.0
          %874 = vmatpush1.msra.mxu0 0.0
          %875 = vmatprep.subr.mxu0 0.0
          %876 = vmatpush1.msra.mxu0 0.0
          %877 = vmatprep.subr.mxu0 0.0
          %878 = vmatpush1.msra.mxu0 0.0
          %879 = vmatprep.subr.mxu0 0.0
          %880 = vmatpush1.msra.mxu0 0.0
          %881 = vmatprep.subr.mxu0 0.0
          %882 = vmatpush1.msra.mxu0 0.0
          %883 = vmatprep.subr.mxu0 0.0
          %884 = vmatpush1.msra.mxu0 0.0
          %885 = vmatprep.subr.mxu0 0.0
          %886 = vmatpush1.msra.mxu0 0.0
          %887 = vmatprep.subr.mxu0 0.0
          %888 = vmatpush1.msra.mxu0 0.0
          %889 = vmatprep.subr.mxu0 0.0
          %890 = vmatpush1.msra.mxu0 0.0
          %891 = vmatprep.subr.mxu0 0.0
          %892 = vmatpush1.msra.mxu0 0.0
          %893 = vmatprep.subr.mxu0 0.0
          %894 = vmatpush1.msra.mxu0 0.0
          %895 = vmatprep.subr.mxu0 0.0
          %896 = vmatpush1.msra.mxu0 0.0
          %897 = vmatprep.subr.mxu0 0.0
          %898 = vmatpush1.msra.mxu0 0.0
          %899 = vmatprep.subr.mxu0 0.0
          %900 = vmatpush1.msra.mxu0 0.0
          %901 = vmatprep.subr.mxu0 0.0
          %902 = vmatpush1.msra.mxu0 0.0
          %903 = vmatprep.subr.mxu0 0.0
          %904 = vmatpush1.msra.mxu0 0.0
          %905 = vmatprep.subr.mxu0 0.0
          %906 = vmatpush1.msra.mxu0 0.0
          %907 = vmatprep.subr.mxu0 0.0
          %908 = vmatpush1.msra.mxu0 0.0
          %909 = vmatprep.subr.mxu0 0.0
          %910 = vmatpush1.msra.mxu0 0.0
          %911 = vmatprep.subr.mxu0 0.0
          %912 = vmatpush1.msra.mxu0 0.0
          %913 = vmatprep.subr.mxu0 0.0
          %914 = vmatpush1.msra.mxu0 0.0
          %915 = vmatprep.subr.mxu0 0.0
          %916 = vmatpush1.msra.mxu0 0.0
          %917 = vmatprep.mubr.f32.mxu0 0.0
          %918 = vmatmul.mubr.f32.gmra.mrb[0].mxu0 %v851
          %v919 = vpop.f32.mrb[0].mxu0
          %v920 = vadd.f32 0.0, %v919
          %v921 = vpop.f32.mrb[0].mxu0
          %922 = vdwg.mxu0
          %v923 = vmul.f32 %v920, %v920
          %v925 = vrot.slane %v923, 7
          %v927 = vsub.f32 %v920, %v925
          %v928 = vmax.f32 %v927, 0.0
          %v929 = vlaneseq
          %v930 = vshrl.u32 %v929, 7
          %v931 = vsub.s32 0, %v930
          %v932 = vrot.slane %v920, %v931
          %v933 = vsub.f32 %v506, %v932
          %v934 = vsub.f32 %v509, %v932
          %v935 = vsub.f32 %v514, %v932
          %v936 = vsub.f32 %v517, %v932
          %v937 = vsub.f32 %v522, %v932
          %v938 = vsub.f32 %v525, %v932
          %v939 = vsub.f32 %v530, %v932
          %v940 = vsub.f32 %v533, %v932
          %v941 = vsub.f32 %v538, %v932
          %v942 = vsub.f32 %v541, %v932
          %v943 = vsub.f32 %v546, %v932
          %v944 = vsub.f32 %v549, %v932
          %v945 = vsub.f32 %v554, %v932
          %v946 = vsub.f32 %v557, %v932
          %v947 = vsub.f32 %v562, %v932
          %v948 = vsub.f32 %v565, %v932
          %v949 = vsub.f32 %v570, %v932
          %v950 = vsub.f32 %v573, %v932
          %v951 = vsub.f32 %v578, %v932
          %v952 = vsub.f32 %v581, %v932
          %v953 = vsub.f32 %v586, %v932
          %v954 = vsub.f32 %v589, %v932
          %v955 = vsub.f32 %v594, %v932
          %v956 = vsub.f32 %v597, %v932
          %v957 = vsub.f32 %v602, %v932
          %v958 = vsub.f32 %v605, %v932
          %v959 = vsub.f32 %v610, %v932
          %v960 = vsub.f32 %v613, %v932
          %v961 = vsub.f32 %v618, %v932
          %v962 = vsub.f32 %v621, %v932
          %v963 = vsub.f32 %v626, %v932
          %v964 = vsub.f32 %v629, %v932
          %v965 = vadd.f32 %v928, 1e-05
          %v966 = vrsqrt.pop %v965
          %v967 = vlaneseq
          %v968 = vshrl.u32 %v967, 7
          %v969 = vsub.s32 1, %v968
          %v970 = vrot.slane %v966, %v969
          %v971 = vmul.f32 %v933, %v970
          %v972 = vmul.f32 %v934, %v970
          %v973 = vmul.f32 %v935, %v970
          %v974 = vmul.f32 %v936, %v970
          %v975 = vmul.f32 %v937, %v970
          %v976 = vmul.f32 %v938, %v970
          %v977 = vmul.f32 %v939, %v970
          %v978 = vmul.f32 %v940, %v970
          %v979 = vmul.f32 %v941, %v970
          %v980 = vmul.f32 %v942, %v970
          %v981 = vmul.f32 %v943, %v970
          %v982 = vmul.f32 %v944, %v970
          %v983 = vmul.f32 %v945, %v970
          %v984 = vmul.f32 %v946, %v970
          %v985 = vmul.f32 %v947, %v970
          %v986 = vmul.f32 %v948, %v970
          %v987 = vmul.f32 %v949, %v970
          %v988 = vmul.f32 %v950, %v970
          %v989 = vmul.f32 %v951, %v970
          %v990 = vmul.f32 %v952, %v970
          %v991 = vmul.f32 %v953, %v970
          %v992 = vmul.f32 %v954, %v970
          %v993 = vmul.f32 %v955, %v970
          %v994 = vmul.f32 %v956, %v970
          %v995 = vmul.f32 %v957, %v970
          %v996 = vmul.f32 %v958, %v970
          %v997 = vmul.f32 %v959, %v970
          %v998 = vmul.f32 %v960, %v970
          %v999 = vmul.f32 %v961, %v970
          %v1000 = vmul.f32 %v962, %v970
          %v1001 = vmul.f32 %v963, %v970
          %v1002 = vmul.f32 %v964, %v970
          %v1003 = vld [vmem:[%s3] sm:$0x1]
          %v1005 = vlaneseq
          %v1006 = vshrl.u32 %v1005, 7
          %v1007 = vsub.s32 0, %v1006
          %v1008 = vrot.slane %v1003, %v1007
          %v1010 = vmul.f32 %v971, %v1008
          %v1011 = vmul.f32 %v972, %v1008
          %v1012 = vmul.f32 %v973, %v1008
          %v1013 = vmul.f32 %v974, %v1008
          %v1014 = vmul.f32 %v975, %v1008
          %v1015 = vmul.f32 %v976, %v1008
          %v1016 = vmul.f32 %v977, %v1008
          %v1017 = vmul.f32 %v978, %v1008
          %v1018 = vmul.f32 %v979, %v1008
          %v1019 = vmul.f32 %v980, %v1008
          %v1020 = vmul.f32 %v981, %v1008
          %v1021 = vmul.f32 %v982, %v1008
          %v1022 = vmul.f32 %v983, %v1008
          %v1023 = vmul.f32 %v984, %v1008
          %v1024 = vmul.f32 %v985, %v1008
          %v1025 = vmul.f32 %v986, %v1008
          %v1026 = vmul.f32 %v987, %v1008
          %v1027 = vmul.f32 %v988, %v1008
          %v1028 = vmul.f32 %v989, %v1008
          %v1029 = vmul.f32 %v990, %v1008
          %v1030 = vmul.f32 %v991, %v1008
          %v1031 = vmul.f32 %v992, %v1008
          %v1032 = vmul.f32 %v993, %v1008
          %v1033 = vmul.f32 %v994, %v1008
          %v1034 = vmul.f32 %v995, %v1008
          %v1035 = vmul.f32 %v996, %v1008
          %v1036 = vmul.f32 %v997, %v1008
          %v1037 = vmul.f32 %v998, %v1008
          %v1038 = vmul.f32 %v999, %v1008
          %v1039 = vmul.f32 %v1000, %v1008
          %v1040 = vmul.f32 %v1001, %v1008
          %v1041 = vmul.f32 %v1002, %v1008
          %v1042 = vld [vmem:[%s4] sm:$0x1]
          %v1044 = vlaneseq
          %v1045 = vshrl.u32 %v1044, 7
          %v1046 = vsub.s32 0, %v1045
          %v1047 = vrot.slane %v1042, %v1046
          %v1049 = vadd.f32 %v1010, %v1047
          %v1050 = vadd.f32 %v1011, %v1047
          %v1051 = vadd.f32 %v1012, %v1047
          %v1052 = vadd.f32 %v1013, %v1047
          %v1053 = vadd.f32 %v1014, %v1047
          %v1054 = vadd.f32 %v1015, %v1047
          %v1055 = vadd.f32 %v1016, %v1047
          %v1056 = vadd.f32 %v1017, %v1047
          %v1057 = vadd.f32 %v1018, %v1047
          %v1058 = vadd.f32 %v1019, %v1047
          %v1059 = vadd.f32 %v1020, %v1047
          %v1060 = vadd.f32 %v1021, %v1047
          %v1061 = vadd.f32 %v1022, %v1047
          %v1062 = vadd.f32 %v1023, %v1047
          %v1063 = vadd.f32 %v1024, %v1047
          %v1064 = vadd.f32 %v1025, %v1047
          %v1065 = vadd.f32 %v1026, %v1047
          %v1066 = vadd.f32 %v1027, %v1047
          %v1067 = vadd.f32 %v1028, %v1047
          %v1068 = vadd.f32 %v1029, %v1047
          %v1069 = vadd.f32 %v1030, %v1047
          %v1070 = vadd.f32 %v1031, %v1047
          %v1071 = vadd.f32 %v1032, %v1047
          %v1072 = vadd.f32 %v1033, %v1047
          %v1073 = vadd.f32 %v1034, %v1047
          %v1074 = vadd.f32 %v1035, %v1047
          %v1075 = vadd.f32 %v1036, %v1047
          %v1076 = vadd.f32 %v1037, %v1047
          %v1077 = vadd.f32 %v1038, %v1047
          %v1078 = vadd.f32 %v1039, %v1047
          %v1079 = vadd.f32 %v1040, %v1047
          %v1080 = vadd.f32 %v1041, %v1047
          %1081 = vst [vmem:[%s332] sm:$0xff] %v1049
          %1082 = vst [vmem:[%s332 + $0x8] sm:$0xff] %v1050
          %1083 = vst [vmem:[%s332 + $0x10] sm:$0xff] %v1051
          %1084 = vst [vmem:[%s332 + $0x18] sm:$0xff] %v1052
          %1085 = vst [vmem:[%s332 + $0x20] sm:$0xff] %v1053
          %1086 = vst [vmem:[%s332 + $0x28] sm:$0xff] %v1054
          %1087 = vst [vmem:[%s332 + $0x30] sm:$0xff] %v1055
          %1088 = vst [vmem:[%s332 + $0x38] sm:$0xff] %v1056
          %1089 = vst [vmem:[%s332 + $0x40] sm:$0xff] %v1057
          %1090 = vst [vmem:[%s332 + $0x48] sm:$0xff] %v1058
          %1091 = vst [vmem:[%s332 + $0x50] sm:$0xff] %v1059
          %1092 = vst [vmem:[%s332 + $0x58] sm:$0xff] %v1060
          %1093 = vst [vmem:[%s332 + $0x60] sm:$0xff] %v1061
          %1094 = vst [vmem:[%s332 + $0x68] sm:$0xff] %v1062
          %1095 = vst [vmem:[%s332 + $0x70] sm:$0xff] %v1063
          %1096 = vst [vmem:[%s332 + $0x78] sm:$0xff] %v1064
          %1097 = vst [vmem:[%s332 + $0x80] sm:$0xff] %v1065
          %1098 = vst [vmem:[%s332 + $0x88] sm:$0xff] %v1066
          %1099 = vst [vmem:[%s332 + $0x90] sm:$0xff] %v1067
          %1100 = vst [vmem:[%s332 + $0x98] sm:$0xff] %v1068
          %1101 = vst [vmem:[%s332 + $0xa0] sm:$0xff] %v1069
          %1102 = vst [vmem:[%s332 + $0xa8] sm:$0xff] %v1070
          %1103 = vst [vmem:[%s332 + $0xb0] sm:$0xff] %v1071
          %1104 = vst [vmem:[%s332 + $0xb8] sm:$0xff] %v1072
          %1105 = vst [vmem:[%s332 + $0xc0] sm:$0xff] %v1073
          %1106 = vst [vmem:[%s332 + $0xc8] sm:$0xff] %v1074
          %1107 = vst [vmem:[%s332 + $0xd0] sm:$0xff] %v1075
          %1108 = vst [vmem:[%s332 + $0xd8] sm:$0xff] %v1076
          %1109 = vst [vmem:[%s332 + $0xe0] sm:$0xff] %v1077
          %1110 = vst [vmem:[%s332 + $0xe8] sm:$0xff] %v1078
          %1111 = vst [vmem:[%s332 + $0xf0] sm:$0xff] %v1079
          %1112 = vst [vmem:[%s332 + $0xf8] sm:$0xff] %v1080
        $region64: #{dino_head_forward.2} parent=47 // pred_fallthru
          _
        %s1113 = smul.u32 32, %s28
        %p1114 = scmp.lt.s32.totalorder %s26, 1
        %s1115 = scalar_select %p1114, %s26, 1
        %p1116 = scmp.lt.s32.totalorder %s1113, 31
        %s1117 = scalar_select %p1116, %s1113, 31
        %s1118 = smul.addr %s1115, 32
        %s1119 = sadd.s32 %s1117, %s1118
        %s1120 = smul.addr %s1119, 8
        %s1121 = scalar_lea.vmem %s7, %s1120
        // Predicated region
        $region65: #{dino_head_forward.2} parent=47 // pred_check
          %p1122 = pneg %p214
        $region66: #{dino_head_forward.2} parent=47 // pred_check_branch
          %1124 = sbr.rel (%p1122) target = $region68
        $region67: #{dino_head_forward.2} parent=47 // pred_region
          %s1125 = smul.u32 32, %s28
        $region68: #{dino_head_forward.2} parent=47 // pred_fallthru
          _
      $region48: #{dino_head_forward.2} parent=5 // pred_fallthru
        _
      %p1126 = scmp.le.s32.totalorder 2, %s16
      // Predicated region
      $region69: #{dino_head_forward.2} parent=5 // pred_check
        %p1127 = pneg %p1126
      $region70: #{dino_head_forward.2} parent=5 // pred_check_branch
        %1129 = sbr.rel (%p1127) target = $region72
      $region71: #{dino_head_forward.2} parent=5 // pred_region
        %s1130 = ssub.s32 %s16, 2
        // Predicated region
        $region73: #{dino_head_forward.2} parent=71 // pred_check
          %p1131 = pneg %p220
        $region74: #{dino_head_forward.2} parent=71 // pred_check_branch
          %1133 = sbr.rel (%p1131) target = $region76
        $region75: #{dino_head_forward.2} parent=71 // pred_region
          %s1134 = smul.u32 32, %s31
          %p1135 = scmp.lt.s32.totalorder %s29, 1
          %s1136 = scalar_select %p1135, %s29, 1
          %p1137 = scmp.lt.s32.totalorder %s1134, 31
          %s1138 = scalar_select %p1137, %s1134, 31
          %s1139 = smul.addr %s1136, 32
          %s1140 = sadd.s32 %s1138, %s1139
          %s1141 = smul.addr %s1140, 8
          %s1142 = scalar_lea.vmem %s7, %s1141
        $region76: #{dino_head_forward.2} parent=71 // pred_fallthru
          _
      $region72: #{dino_head_forward.2} parent=5 // pred_fallthru
        _
    $region6: #{dino_head_forward.2} parent=1 // loop_footer
      %s20 = sadd.s32 1, %s16
    $region7: #{dino_head_forward.2} parent=1 // loop_footer_branch
      %15 = sbr.rel target = $region3
    $region8: #{dino_head_forward.2} parent=1 // loop_exit
      _
    %1143 = vsyncpa [#allocation4], 1
    %s1144 = scalar_lea.sflag [#allocation4], 1
    %1145 = vsyncpa %s1144, 1

// kernel: dino_head_forward.3
$region0: #{dino_head_forward.3}
  #allocation0 [shape = 'u32[]', space=smem, size = 0x4, offset = 0x4, fixed_abs, tag = 'smem constant byte address 0x4 - core index']
  #allocation1 [shape = 'u32[144,128]{1,0:T(1,128)}', space=vmem, size = 0x12000, scoped, tag = 'internal scratch']
  %s0 = inlined_call_operand.vmem [shape: f32[96,128], index: 0, kind: input, shape index: {}]
  %s1 = inlined_call_operand.vmem [shape: f32[96,128], index: 1, kind: input, shape index: {}]
  %s2 = inlined_call_operand.vmem [shape: bf16[128,256], index: 2, kind: input, shape index: {}]
  %s3 = inlined_call_operand.vmem [shape: f32[1,256], index: 3, kind: input, shape index: {}]
  %s4 = inlined_call_operand.vmem [shape: bf16[128,128], index: 4, kind: input, shape index: {}]
  %s5 = inlined_call_operand.vmem [shape: f32[1,128], index: 5, kind: input, shape index: {}]
  %s6 = inlined_call_operand.vmem [shape: bf16[128,128], index: 6, kind: input, shape index: {}]
  %s7 = inlined_call_operand.vmem [shape: f32[1,128], index: 7, kind: input, shape index: {}]
  %s8 = inlined_call_operand.vmem [shape: f32[96,128], index: 8, kind: output, shape index: {0}]
  %s9 = inlined_call_operand.vmem [shape: f32[96,128], index: 9, kind: output, shape index: {1}]
  %10 = xla_tuple %s8, %s9
  %s11 = sld [smem:[#allocation0]]
  $region73: #{dino_head_forward.3} parent=0
    _
  %s13 = ssub.s32 1, %s11
  %s14 = scalar_select 0, %s13, %s11
  loop: start=0, step=1, limit=4
  $region2: #{dino_head_forward.3} parent=0 // loop_pre_header
    _
  $region3: #{dino_head_forward.3} parent=0 // loop_header
    %s16 = sphi 0, %s20
    %p17 = scmp.ge.s32.totalorder %s16, 4
    %s26 = sphi 0, %s28
    %s29 = sphi 0, %s26
    %s30 = sphi 0, %s29
    %s46 = sphi 0, %s30
    %s52 = sphi 0, %s54
    %s55 = sphi 0, %s52
    %s56 = sphi 0, %s55
    %s72 = sphi 0, %s56
    %s76 = sphi 0, %s76
    %s78 = sphi 0, %s76
    %s79 = sphi 0, %s78
    %s93 = sphi 0, %s79
    %s97 = sphi 0, %s97
    %s99 = sphi 0, %s97
    %s100 = sphi 0, %s99
    %s114 = sphi 0, %s100
    %s118 = sphi 0, %s118
    %s120 = sphi 0, %s118
    %s121 = sphi 0, %s120
    %s135 = sphi 0, %s121
    %s139 = sphi 0, %s139
    %s141 = sphi 0, %s139
    %s142 = sphi 0, %s141
    %s156 = sphi 0, %s142
    %s160 = sphi 0, %s160
    %s162 = sphi 0, %s160
    %s163 = sphi 0, %s162
    %s177 = sphi 0, %s163
    %s181 = sphi 0, %s181
    %s183 = sphi 0, %s181
    %s184 = sphi 0, %s183
    %s198 = sphi 0, %s184
    %s204 = sphi 0, %s206
    %s207 = sphi 0, %s204
    %s208 = sphi 0, %s207
    %s224 = sphi 0, %s208
    %s230 = sphi 0, %s232
    %s233 = sphi 0, %s230
    %s234 = sphi 0, %s233
    %s250 = sphi 0, %s234
  $region4: #{dino_head_forward.3} parent=0 // loop_header_branch
    %19 = sbr.rel (%p17) target = $region8
  $region5: #{dino_head_forward.3} parent=0 // loop_body
    %s21 = ssub.s32 %s16, 1
    %s22 = ssub.s32 %s16, 2
    %s23 = sadd.s32 %s16, 1
    %s24 = ssub.s32 %s16, %s23
    %p25 = scmp.eq.s32.totalorder %s24, 0
    %s27 = sadd.s32 %s26, 1
    %s28 = scalar_select %p25, %s26, %s27
    %p31 = pneg %p25
    %p32 = scmp.eq.s32.totalorder %s16, 1
    %p33 = por %p31, %p32
    %p34 = scmp.ne.s32.totalorder %s26, %s29
    %p35 = scmp.eq.s32.totalorder %s16, 0
    %p36 = por %p34, %p35
    %p37 = scmp.ne.s32.totalorder %s26, %s29
    %p38 = scmp.eq.s32.totalorder %s21, 1
    %p39 = por %p37, %p38
    %p40 = scmp.ne.s32.totalorder %s29, %s30
    %p41 = scmp.eq.s32.totalorder %s21, 0
    %p42 = por %p40, %p41
    %p43 = scmp.ne.s32.totalorder %s29, %s30
    %p44 = scmp.eq.s32.totalorder %s22, 1
    %p45 = por %p43, %p44
    %p47 = scmp.ne.s32.totalorder %s30, %s46
    %p48 = scmp.eq.s32.totalorder %s22, 0
    %p49 = por %p47, %p48
    %s50 = ssub.s32 %s16, %s23
    %p51 = scmp.eq.s32.totalorder %s50, 0
    %s53 = sadd.s32 %s52, 1
    %s54 = scalar_select %p51, %s52, %s53
    %p57 = pneg %p51
    %p58 = scmp.eq.s32.totalorder %s16, 1
    %p59 = por %p57, %p58
    %p60 = scmp.ne.s32.totalorder %s52, %s55
    %p61 = scmp.eq.s32.totalorder %s16, 0
    %p62 = por %p60, %p61
    %p63 = scmp.ne.s32.totalorder %s52, %s55
    %p64 = scmp.eq.s32.totalorder %s21, 1
    %p65 = por %p63, %p64
    %p66 = scmp.ne.s32.totalorder %s55, %s56
    %p67 = scmp.eq.s32.totalorder %s21, 0
    %p68 = por %p66, %p67
    %p69 = scmp.ne.s32.totalorder %s55, %s56
    %p70 = scmp.eq.s32.totalorder %s22, 1
    %p71 = por %p69, %p70
    %p73 = scmp.ne.s32.totalorder %s56, %s72
    %p74 = scmp.eq.s32.totalorder %s22, 0
    %p75 = por %p73, %p74
    %s77 = sadd.s32 %s76, 1
    %p80 = scmp.eq.s32.totalorder %s16, 1
    %p81 = scmp.ne.s32.totalorder %s76, %s78
    %p82 = scmp.eq.s32.totalorder %s16, 0
    %p83 = por %p81, %p82
    %p84 = scmp.ne.s32.totalorder %s76, %s78
    %p85 = scmp.eq.s32.totalorder %s21, 1
    %p86 = por %p84, %p85
    %p87 = scmp.ne.s32.totalorder %s78, %s79
    %p88 = scmp.eq.s32.totalorder %s21, 0
    %p89 = por %p87, %p88
    %p90 = scmp.ne.s32.totalorder %s78, %s79
    %p91 = scmp.eq.s32.totalorder %s22, 1
    %p92 = por %p90, %p91
    %p94 = scmp.ne.s32.totalorder %s79, %s93
    %p95 = scmp.eq.s32.totalorder %s22, 0
    %p96 = por %p94, %p95
    %s98 = sadd.s32 %s97, 1
    %p101 = scmp.eq.s32.totalorder %s16, 1
    %p102 = scmp.ne.s32.totalorder %s97, %s99
    %p103 = scmp.eq.s32.totalorder %s16, 0
    %p104 = por %p102, %p103
    %p105 = scmp.ne.s32.totalorder %s97, %s99
    %p106 = scmp.eq.s32.totalorder %s21, 1
    %p107 = por %p105, %p106
    %p108 = scmp.ne.s32.totalorder %s99, %s100
    %p109 = scmp.eq.s32.totalorder %s21, 0
    %p110 = por %p108, %p109
    %p111 = scmp.ne.s32.totalorder %s99, %s100
    %p112 = scmp.eq.s32.totalorder %s22, 1
    %p113 = por %p111, %p112
    %p115 = scmp.ne.s32.totalorder %s100, %s114
    %p116 = scmp.eq.s32.totalorder %s22, 0
    %p117 = por %p115, %p116
    %s119 = sadd.s32 %s118, 1
    %p122 = scmp.eq.s32.totalorder %s16, 1
    %p123 = scmp.ne.s32.totalorder %s118, %s120
    %p124 = scmp.eq.s32.totalorder %s16, 0
    %p125 = por %p123, %p124
    %p126 = scmp.ne.s32.totalorder %s118, %s120
    %p127 = scmp.eq.s32.totalorder %s21, 1
    %p128 = por %p126, %p127
    %p129 = scmp.ne.s32.totalorder %s120, %s121
    %p130 = scmp.eq.s32.totalorder %s21, 0
    %p131 = por %p129, %p130
    %p132 = scmp.ne.s32.totalorder %s120, %s121
    %p133 = scmp.eq.s32.totalorder %s22, 1
    %p134 = por %p132, %p133
    %p136 = scmp.ne.s32.totalorder %s121, %s135
    %p137 = scmp.eq.s32.totalorder %s22, 0
    %p138 = por %p136, %p137
    %s140 = sadd.s32 %s139, 1
    %p143 = scmp.eq.s32.totalorder %s16, 1
    %p144 = scmp.ne.s32.totalorder %s139, %s141
    %p145 = scmp.eq.s32.totalorder %s16, 0
    %p146 = por %p144, %p145
    %p147 = scmp.ne.s32.totalorder %s139, %s141
    %p148 = scmp.eq.s32.totalorder %s21, 1
    %p149 = por %p147, %p148
    %p150 = scmp.ne.s32.totalorder %s141, %s142
    %p151 = scmp.eq.s32.totalorder %s21, 0
    %p152 = por %p150, %p151
    %p153 = scmp.ne.s32.totalorder %s141, %s142
    %p154 = scmp.eq.s32.totalorder %s22, 1
    %p155 = por %p153, %p154
    %p157 = scmp.ne.s32.totalorder %s142, %s156
    %p158 = scmp.eq.s32.totalorder %s22, 0
    %p159 = por %p157, %p158
    %s161 = sadd.s32 %s160, 1
    %p164 = scmp.eq.s32.totalorder %s16, 1
    %p165 = scmp.ne.s32.totalorder %s160, %s162
    %p166 = scmp.eq.s32.totalorder %s16, 0
    %p167 = por %p165, %p166
    %p168 = scmp.ne.s32.totalorder %s160, %s162
    %p169 = scmp.eq.s32.totalorder %s21, 1
    %p170 = por %p168, %p169
    %p171 = scmp.ne.s32.totalorder %s162, %s163
    %p172 = scmp.eq.s32.totalorder %s21, 0
    %p173 = por %p171, %p172
    %p174 = scmp.ne.s32.totalorder %s162, %s163
    %p175 = scmp.eq.s32.totalorder %s22, 1
    %p176 = por %p174, %p175
    %p178 = scmp.ne.s32.totalorder %s163, %s177
    %p179 = scmp.eq.s32.totalorder %s22, 0
    %p180 = por %p178, %p179
    %s182 = sadd.s32 %s181, 1
    %p185 = scmp.eq.s32.totalorder %s16, 1
    %p186 = scmp.ne.s32.totalorder %s181, %s183
    %p187 = scmp.eq.s32.totalorder %s16, 0
    %p188 = por %p186, %p187
    %p189 = scmp.ne.s32.totalorder %s181, %s183
    %p190 = scmp.eq.s32.totalorder %s21, 1
    %p191 = por %p189, %p190
    %p192 = scmp.ne.s32.totalorder %s183, %s184
    %p193 = scmp.eq.s32.totalorder %s21, 0
    %p194 = por %p192, %p193
    %p195 = scmp.ne.s32.totalorder %s183, %s184
    %p196 = scmp.eq.s32.totalorder %s22, 1
    %p197 = por %p195, %p196
    %p199 = scmp.ne.s32.totalorder %s184, %s198
    %p200 = scmp.eq.s32.totalorder %s22, 0
    %p201 = por %p199, %p200
    %s202 = ssub.s32 %s16, %s23
    %p203 = scmp.eq.s32.totalorder %s202, 0
    %s205 = sadd.s32 %s204, 1
    %s206 = scalar_select %p203, %s204, %s205
    %p209 = pneg %p203
    %p210 = scmp.eq.s32.totalorder %s16, 1
    %p211 = por %p209, %p210
    %p212 = scmp.ne.s32.totalorder %s204, %s207
    %p213 = scmp.eq.s32.totalorder %s16, 0
    %p214 = por %p212, %p213
    %p215 = scmp.ne.s32.totalorder %s204, %s207
    %p216 = scmp.eq.s32.totalorder %s21, 1
    %p217 = por %p215, %p216
    %p218 = scmp.ne.s32.totalorder %s207, %s208
    %p219 = scmp.eq.s32.totalorder %s21, 0
    %p220 = por %p218, %p219
    %p221 = scmp.ne.s32.totalorder %s207, %s208
    %p222 = scmp.eq.s32.totalorder %s22, 1
    %p223 = por %p221, %p222
    %p225 = scmp.ne.s32.totalorder %s208, %s224
    %p226 = scmp.eq.s32.totalorder %s22, 0
    %p227 = por %p225, %p226
    %s228 = ssub.s32 %s16, %s23
    %p229 = scmp.eq.s32.totalorder %s228, 0
    %s231 = sadd.s32 %s230, 1
    %s232 = scalar_select %p229, %s230, %s231
    %p235 = pneg %p229
    %p236 = scmp.eq.s32.totalorder %s16, 1
    %p237 = por %p235, %p236
    %p238 = scmp.ne.s32.totalorder %s230, %s233
    %p239 = scmp.eq.s32.totalorder %s16, 0
    %p240 = por %p238, %p239
    %p241 = scmp.ne.s32.totalorder %s230, %s233
    %p242 = scmp.eq.s32.totalorder %s21, 1
    %p243 = por %p241, %p242
    %p244 = scmp.ne.s32.totalorder %s233, %s234
    %p245 = scmp.eq.s32.totalorder %s21, 0
    %p246 = por %p244, %p245
    %p247 = scmp.ne.s32.totalorder %s233, %s234
    %p248 = scmp.eq.s32.totalorder %s22, 1
    %p249 = por %p247, %p248
    %p251 = scmp.ne.s32.totalorder %s234, %s250
    %p252 = scmp.eq.s32.totalorder %s22, 0
    %p253 = por %p251, %p252
    %p254 = scmp.le.s32.totalorder 1, %s16
    %p255 = scmp.lt.s32.totalorder %s16, 3
    %p256 = pnand %p254, %p255
    %p257 = pneg %p256
    // Predicated region
    $region9: #{dino_head_forward.3} parent=5 // pred_check
      _
    $region10: #{dino_head_forward.3} parent=5 // pred_check_branch
      %259 = sbr.rel (%p256) target = $region12
    $region11: #{dino_head_forward.3} parent=5 // pred_region
      %s260 = ssub.s32 %s16, 1
      // Predicated region
      $region13: #{dino_head_forward.3} parent=11 // pred_check
        %p261 = pneg %p89
      $region14: #{dino_head_forward.3} parent=11 // pred_check_branch
        %263 = sbr.rel (%p261) target = $region16
      $region15: #{dino_head_forward.3} parent=11 // pred_region
        _
      $region16: #{dino_head_forward.3} parent=11 // pred_fallthru
        _
      // Predicated region
      $region17: #{dino_head_forward.3} parent=11 // pred_check
        %p264 = pneg %p110
      $region18: #{dino_head_forward.3} parent=11 // pred_check_branch
        %266 = sbr.rel (%p264) target = $region20
      $region19: #{dino_head_forward.3} parent=11 // pred_region
        _
      $region20: #{dino_head_forward.3} parent=11 // pred_fallthru
        _
      // Predicated region
      $region21: #{dino_head_forward.3} parent=11 // pred_check
        %p267 = pneg %p131
      $region22: #{dino_head_forward.3} parent=11 // pred_check_branch
        %269 = sbr.rel (%p267) target = $region24
      $region23: #{dino_head_forward.3} parent=11 // pred_region
        _
      $region24: #{dino_head_forward.3} parent=11 // pred_fallthru
        _
      // Predicated region
      $region25: #{dino_head_forward.3} parent=11 // pred_check
        %p270 = pneg %p152
      $region26: #{dino_head_forward.3} parent=11 // pred_check_branch
        %272 = sbr.rel (%p270) target = $region28
      $region27: #{dino_head_forward.3} parent=11 // pred_region
        _
      $region28: #{dino_head_forward.3} parent=11 // pred_fallthru
        _
      // Predicated region
      $region29: #{dino_head_forward.3} parent=11 // pred_check
        %p273 = pneg %p173
      $region30: #{dino_head_forward.3} parent=11 // pred_check_branch
        %275 = sbr.rel (%p273) target = $region32
      $region31: #{dino_head_forward.3} parent=11 // pred_region
        _
      $region32: #{dino_head_forward.3} parent=11 // pred_fallthru
        _
      // Predicated region
      $region33: #{dino_head_forward.3} parent=11 // pred_check
        %p276 = pneg %p194
      $region34: #{dino_head_forward.3} parent=11 // pred_check_branch
        %278 = sbr.rel (%p276) target = $region36
      $region35: #{dino_head_forward.3} parent=11 // pred_region
        _
      $region36: #{dino_head_forward.3} parent=11 // pred_fallthru
        _
    $region12: #{dino_head_forward.3} parent=5 // pred_fallthru
      _
    %p279 = scmp.lt.s32.totalorder %s16, 2
    // Predicated region
    $region37: #{dino_head_forward.3} parent=5 // pred_check
      %p280 = pneg %p279
    $region38: #{dino_head_forward.3} parent=5 // pred_check_branch
      %282 = sbr.rel (%p280) target = $region40
    $region39: #{dino_head_forward.3} parent=5 // pred_region
      // Predicated region
      $region41: #{dino_head_forward.3} parent=39 // pred_check
        %p283 = pneg %p36
      $region42: #{dino_head_forward.3} parent=39 // pred_check_branch
        %285 = sbr.rel (%p283) target = $region44
      $region43: #{dino_head_forward.3} parent=39 // pred_region
        %s286 = smul.u32 6, %s16
        %p287 = scmp.lt.s32.totalorder %s286, 11
        %s288 = scalar_select %p287, %s286, 11
        %s289 = smul.addr %s288, 8
        %s290 = scalar_lea.vmem %s0, %s289
        %s291 = smul.u32 6, %s16
      $region44: #{dino_head_forward.3} parent=39 // pred_fallthru
        _
      // Predicated region
      $region45: #{dino_head_forward.3} parent=39 // pred_check
        %p292 = pneg %p62
      $region46: #{dino_head_forward.3} parent=39 // pred_check_branch
        %294 = sbr.rel (%p292) target = $region48
      $region47: #{dino_head_forward.3} parent=39 // pred_region
        %s295 = smul.u32 6, %s16
        %p296 = scmp.lt.s32.totalorder %s295, 11
        %s297 = scalar_select %p296, %s295, 11
        %s298 = smul.addr %s297, 8
        %s299 = scalar_lea.vmem %s1, %s298
        %s300 = smul.u32 6, %s16
      $region48: #{dino_head_forward.3} parent=39 // pred_fallthru
        _
    $region40: #{dino_head_forward.3} parent=5 // pred_fallthru
      _
    %p301 = scmp.le.s32.totalorder 1, %s16
    %p302 = scmp.lt.s32.totalorder %s16, 3
    %p303 = pnand %p301, %p302
    %p304 = pneg %p303
    // Predicated region
    $region49: #{dino_head_forward.3} parent=5 // pred_check
      _
    $region50: #{dino_head_forward.3} parent=5 // pred_check_branch
      %306 = sbr.rel (%p303) target = $region52
    $region51: #{dino_head_forward.3} parent=5 // pred_region
      %s307 = ssub.s32 %s16, 1
      %s308 = smul.u32 6, %s21
      %p309 = scmp.lt.s32.totalorder %s308, 11
      %s310 = scalar_select %p309, %s308, 11
      %s311 = smul.addr %s310, 8
      %s312 = scalar_lea.vmem %s0, %s311
      %p313 = pneg %p42
      %p314 = pneg %p39
      %s315 = smul.u32 6, %s21
      %p316 = scmp.lt.s32.totalorder %s315, 11
      %s317 = scalar_select %p316, %s315, 11
      %s318 = smul.addr %s317, 8
      %s319 = scalar_lea.vmem %s1, %s318
      %p320 = pneg %p68
      %p321 = pneg %p65
      %p322 = pneg %p89
      %p323 = pneg %p86
      %p324 = pneg %p110
      %p325 = pneg %p107
      %p326 = pneg %p131
      %p327 = pneg %p128
      %p328 = pneg %p152
      %p329 = pneg %p149
      %p330 = pneg %p173
      %p331 = pneg %p170
      %p332 = pneg %p194
      %p333 = pneg %p191
      %p334 = pneg %p220
      %p335 = pneg %p217
      %s336 = smul.u32 6, %s21
      %p337 = scmp.lt.s32.totalorder %s336, 11
      %s338 = scalar_select %p337, %s336, 11
      %s339 = smul.addr %s338, 8
      %s340 = scalar_lea.vmem %s8, %s339
      %p341 = pneg %p246
      %p342 = pneg %p243
      %s343 = smul.u32 6, %s21
      %p344 = scmp.lt.s32.totalorder %s343, 11
      %s345 = scalar_select %p344, %s343, 11
      %s346 = smul.addr %s345, 8
      %s347 = scalar_lea.vmem %s9, %s346
      %s348 = smul.u32 6, %s21
      %p349 = scmp.lt.s32.totalorder %s348, 11
      %s350 = scalar_select %p349, %s348, 11
      %s351 = smul.addr %s350, 8
      %s352 = scalar_lea.vmem %s0, %s351
      %s353 = smul.u32 6, %s21
      %s354 = smul.u32 6, %s21
      %p355 = scmp.lt.s32.totalorder %s354, 11
      %s356 = scalar_select %p355, %s354, 11
      %s357 = smul.addr %s356, 8
      %s358 = scalar_lea.vmem %s1, %s357
      %s359 = smul.u32 6, %s21
      %s360 = smul.u32 6, %s21
      %p361 = scmp.lt.s32.totalorder %s360, 11
      %s362 = scalar_select %p361, %s360, 11
      %s363 = smul.addr %s362, 8
      %s364 = scalar_lea.vmem %s8, %s363
      %s365 = smul.u32 6, %s21
      %s366 = smul.u32 6, %s21
      %p367 = scmp.lt.s32.totalorder %s366, 11
      %s368 = scalar_select %p367, %s366, 11
      %s369 = smul.addr %s368, 8
      %s370 = scalar_lea.vmem %s9, %s369
      %s371 = smul.u32 6, %s21
      %v373 = vld [vmem:[%s352] sm:$0xff]
      %v374 = vld [vmem:[%s352 + $0x8] sm:$0xff]
      %v375 = vld [vmem:[%s352 + $0x10] sm:$0xff]
      %v376 = vld [vmem:[%s352 + $0x18] sm:$0xff]
      %v377 = vld [vmem:[%s352 + $0x20] sm:$0xff]
      %v378 = vld [vmem:[%s352 + $0x28] sm:$0xff]
      %v379 = vpack.c.bf16 %v374, %v373
      %v380 = vpack.c.bf16 %v376, %v375
      %v381 = vpack.c.bf16 %v378, %v377
      %v382 = vld [vmem:[%s2] sm:$0xff]
      %v383 = vld [vmem:[%s2 + $0x8] sm:$0xff]
      %v384 = vld [vmem:[%s2 + $0x10] sm:$0xff]
      %v385 = vld [vmem:[%s2 + $0x18] sm:$0xff]
      %v386 = vld [vmem:[%s2 + $0x20] sm:$0xff]
      %v387 = vld [vmem:[%s2 + $0x28] sm:$0xff]
      %v388 = vld [vmem:[%s2 + $0x30] sm:$0xff]
      %v389 = vld [vmem:[%s2 + $0x38] sm:$0xff]
      %v390 = vld [vmem:[%s2 + $0x40] sm:$0xff]
      %v391 = vld [vmem:[%s2 + $0x48] sm:$0xff]
      %v392 = vld [vmem:[%s2 + $0x50] sm:$0xff]
      %v393 = vld [vmem:[%s2 + $0x58] sm:$0xff]
      %v394 = vld [vmem:[%s2 + $0x60] sm:$0xff]
      %v395 = vld [vmem:[%s2 + $0x68] sm:$0xff]
      %v396 = vld [vmem:[%s2 + $0x70] sm:$0xff]
      %v397 = vld [vmem:[%s2 + $0x78] sm:$0xff]
      %v398 = vld [vmem:[%s3] sm:$0x3]
      %v400 = vlaneseq
      %v401 = vshrl.u32 %v400, 7
      %v402 = vsub.s32 0, %v401
      %v403 = vrot.slane %v398, %v402
      %v404 = vlaneseq
      %v405 = vshrl.u32 %v404, 7
      %v406 = vsub.s32 1, %v405
      %v407 = vrot.slane %v398, %v406
      %v426 = vunpack.c.l.b16 %v382
      %v427 = vunpack.c.h.b16 %v382
      %v428 = vunpack.c.l.b16 %v383
      %v429 = vunpack.c.h.b16 %v383
      %v430 = vunpack.c.l.b16 %v384
      %v431 = vunpack.c.h.b16 %v384
      %v432 = vunpack.c.l.b16 %v385
      %v433 = vunpack.c.h.b16 %v385
      %v434 = vunpack.c.l.b16 %v386
      %v435 = vunpack.c.h.b16 %v386
      %v436 = vunpack.c.l.b16 %v387
      %v437 = vunpack.c.h.b16 %v387
      %v438 = vunpack.c.l.b16 %v388
      %v439 = vunpack.c.h.b16 %v388
      %v440 = vunpack.c.l.b16 %v389
      %v441 = vunpack.c.h.b16 %v389
      %v442 = vunpack.c.l.b16 %v390
      %v443 = vunpack.c.h.b16 %v390
      %v444 = vunpack.c.l.b16 %v391
      %v445 = vunpack.c.h.b16 %v391
      %v446 = vunpack.c.l.b16 %v392
      %v447 = vunpack.c.h.b16 %v392
      %v448 = vunpack.c.l.b16 %v393
      %v449 = vunpack.c.h.b16 %v393
      %v450 = vunpack.c.l.b16 %v394
      %v451 = vunpack.c.h.b16 %v394
      %v452 = vunpack.c.l.b16 %v395
      %v453 = vunpack.c.h.b16 %v395
      %v454 = vunpack.c.l.b16 %v396
      %v455 = vunpack.c.h.b16 %v396
      %v456 = vunpack.c.l.b16 %v397
      %v457 = vunpack.c.h.b16 %v397
      %v458 = vpack.c.b16 %v428, %v426
      %v459 = vpack.c.b16 %v429, %v427
      %v460 = vpack.c.b16 %v432, %v430
      %v461 = vpack.c.b16 %v433, %v431
      %v462 = vpack.c.b16 %v436, %v434
      %v463 = vpack.c.b16 %v437, %v435
      %v464 = vpack.c.b16 %v440, %v438
      %v465 = vpack.c.b16 %v441, %v439
      %v466 = vpack.c.b16 %v444, %v442
      %v467 = vpack.c.b16 %v445, %v443
      %v468 = vpack.c.b16 %v448, %v446
      %v469 = vpack.c.b16 %v449, %v447
      %v470 = vpack.c.b16 %v452, %v450
      %v471 = vpack.c.b16 %v453, %v451
      %v472 = vpack.c.b16 %v456, %v454
      %v473 = vpack.c.b16 %v457, %v455
      %490 = vmatprep.subr.bf16.mxu0 %v459
      %491 = vmatpush1.bf16.msra.mxu0 %v458
      %492 = vmatprep.subr.bf16.mxu0 %v461
      %493 = vmatpush1.bf16.msra.mxu0 %v460
      %494 = vmatprep.subr.bf16.mxu0 %v463
      %495 = vmatpush1.bf16.msra.mxu0 %v462
      %496 = vmatprep.subr.bf16.mxu0 %v465
      %497 = vmatpush1.bf16.msra.mxu0 %v464
      %498 = vmatprep.subr.bf16.mxu0 %v467
      %499 = vmatpush1.bf16.msra.mxu0 %v466
      %500 = vmatprep.subr.bf16.mxu0 %v469
      %501 = vmatpush1.bf16.msra.mxu0 %v468
      %502 = vmatprep.subr.bf16.mxu0 %v471
      %503 = vmatpush1.bf16.msra.mxu0 %v470
      %504 = vmatprep.subr.bf16.mxu0 %v473
      %505 = vmatpush1.bf16.msra.mxu0 %v472
      %506 = vmatprep.subr.bf16.mxu0 0
      %507 = vmatpush1.bf16.msra.mxu0 0
      %508 = vmatprep.subr.bf16.mxu0 0
      %509 = vmatpush1.bf16.msra.mxu0 0
      %510 = vmatprep.subr.bf16.mxu0 0
      %511 = vmatpush1.bf16.msra.mxu0 0
      %512 = vmatprep.subr.bf16.mxu0 0
      %513 = vmatpush1.bf16.msra.mxu0 0
      %514 = vmatprep.subr.bf16.mxu0 0
      %515 = vmatpush1.bf16.msra.mxu0 0
      %516 = vmatprep.subr.bf16.mxu0 0
      %517 = vmatpush1.bf16.msra.mxu0 0
      %518 = vmatprep.subr.bf16.mxu0 0
      %519 = vmatpush1.bf16.msra.mxu0 0
      %520 = vmatprep.subr.bf16.mxu0 0
      %521 = vmatpush1.bf16.msra.mxu0 0
      %522 = vmatprep.mubr.bf16.mxu0 0
      %523 = vmatmul.mubr.bf16.gmra.mrb[0].mxu0 %v379
      %v524 = vpop.f32.mrb[0].mxu0
      %v525 = vadd.f32 %v403, %v524
      %v526 = vpop.f32.mrb[0].mxu0
      %v527 = vadd.f32 %v407, %v526
      %v528 = vpop.f32.mrb[0].mxu0
      %v529 = vadd.f32 %v403, %v528
      %v530 = vpop.f32.mrb[0].mxu0
      %v531 = vadd.f32 %v407, %v530
      %532 = vmatprep.mubr.bf16.mxu0 0
      %533 = vmatmul.mubr.bf16.gmra.mrb[0].mxu0 %v380
      %v534 = vpop.f32.mrb[0].mxu0
      %v535 = vadd.f32 %v403, %v534
      %v536 = vpop.f32.mrb[0].mxu0
      %v537 = vadd.f32 %v407, %v536
      %v538 = vpop.f32.mrb[0].mxu0
      %v539 = vadd.f32 %v403, %v538
      %v540 = vpop.f32.mrb[0].mxu0
      %v541 = vadd.f32 %v407, %v540
      %542 = vmatprep.mubr.bf16.mxu0 0
      %543 = vmatmul.mubr.bf16.gmra.mrb[0].mxu0 %v381
      %v544 = vpop.f32.mrb[0].mxu0
      %v545 = vadd.f32 %v403, %v544
      %v546 = vpop.f32.mrb[0].mxu0
      %v547 = vadd.f32 %v407, %v546
      %v548 = vpop.f32.mrb[0].mxu0
      %v549 = vadd.f32 %v403, %v548
      %v550 = vpop.f32.mrb[0].mxu0
      %v551 = vadd.f32 %v407, %v550
      %552 = vdwg.mxu0
      %553 = vst [vmem:[%s364] sm:$0xff] %v525
      %554 = vst [vmem:[%s364 + $0x8] sm:$0xff] %v529
      %555 = vst [vmem:[%s364 + $0x10] sm:$0xff] %v535
      %556 = vst [vmem:[%s364 + $0x18] sm:$0xff] %v539
      %557 = vst [vmem:[%s364 + $0x20] sm:$0xff] %v545
      %558 = vst [vmem:[%s364 + $0x28] sm:$0xff] %v549
      %v559 = vmax.f32 %v527, 0.0
      %v560 = vmax.f32 %v531, 0.0
      %v561 = vmax.f32 %v537, 0.0
      %v562 = vmax.f32 %v541, 0.0
      %v563 = vmax.f32 %v547, 0.0
      %v564 = vmax.f32 %v551, 0.0
      %v565 = vpack.c.bf16 %v560, %v559
      %v566 = vpack.c.bf16 %v562, %v561
      %v567 = vpack.c.bf16 %v564, %v563
      %v568 = vld [vmem:[%s4] sm:$0xf]
      %v569 = vld [vmem:[%s4 + $0x4] sm:$0xf]
      %v570 = vld [vmem:[%s4 + $0x8] sm:$0xf]
      %v571 = vld [vmem:[%s4 + $0xc] sm:$0xf]
      %v572 = vld [vmem:[%s4 + $0x10] sm:$0xf]
      %v573 = vld [vmem:[%s4 + $0x14] sm:$0xf]
      %v574 = vld [vmem:[%s4 + $0x18] sm:$0xf]
      %v575 = vld [vmem:[%s4 + $0x1c] sm:$0xf]
      %v576 = vld [vmem:[%s4 + $0x20] sm:$0xf]
      %v577 = vld [vmem:[%s4 + $0x24] sm:$0xf]
      %v578 = vld [vmem:[%s4 + $0x28] sm:$0xf]
      %v579 = vld [vmem:[%s4 + $0x2c] sm:$0xf]
      %v580 = vld [vmem:[%s4 + $0x30] sm:$0xf]
      %v581 = vld [vmem:[%s4 + $0x34] sm:$0xf]
      %v582 = vld [vmem:[%s4 + $0x38] sm:$0xf]
      %v583 = vld [vmem:[%s4 + $0x3c] sm:$0xf]
      %v584 = vld [vmem:[%s5] sm:$0x1]
      %v586 = vlaneseq
      %v587 = vshrl.u32 %v586, 7
      %v588 = vsub.s32 0, %v587
      %v589 = vrot.slane %v584, %v588
      %v607 = vunpack.c.l.b16 %v568
      %v608 = vunpack.c.l.b16 %v569
      %v609 = vunpack.c.l.b16 %v570
      %v610 = vunpack.c.l.b16 %v571
      %v611 = vunpack.c.l.b16 %v572
      %v612 = vunpack.c.l.b16 %v573
      %v613 = vunpack.c.l.b16 %v574
      %v614 = vunpack.c.l.b16 %v575
      %v615 = vunpack.c.l.b16 %v576
      %v616 = vunpack.c.l.b16 %v577
      %v617 = vunpack.c.l.b16 %v578
      %v618 = vunpack.c.l.b16 %v579
      %v619 = vunpack.c.l.b16 %v580
      %v620 = vunpack.c.l.b16 %v581
      %v621 = vunpack.c.l.b16 %v582
      %v622 = vunpack.c.l.b16 %v583
      %v623 = vpack.c.b16 %v608, %v607
      %v624 = vpack.c.b16 %v610, %v609
      %v625 = vpack.c.b16 %v612, %v611
      %v626 = vpack.c.b16 %v614, %v613
      %v627 = vpack.c.b16 %v616, %v615
      %v628 = vpack.c.b16 %v618, %v617
      %v629 = vpack.c.b16 %v620, %v619
      %v630 = vpack.c.b16 %v622, %v621
      %639 = vmatprep.subr.bf16.mxu0 0
      %640 = vmatpush1.bf16.msra.mxu0 %v623
      %641 = vmatprep.subr.bf16.mxu0 0
      %642 = vmatpush1.bf16.msra.mxu0 %v624
      %643 = vmatprep.subr.bf16.mxu0 0
      %644 = vmatpush1.bf16.msra.mxu0 %v625
      %645 = vmatprep.subr.bf16.mxu0 0
      %646 = vmatpush1.bf16.msra.mxu0 %v626
      %647 = vmatprep.subr.bf16.mxu0 0
      %648 = vmatpush1.bf16.msra.mxu0 %v627
      %649 = vmatprep.subr.bf16.mxu0 0
      %650 = vmatpush1.bf16.msra.mxu0 %v628
      %651 = vmatprep.subr.bf16.mxu0 0
      %652 = vmatpush1.bf16.msra.mxu0 %v629
      %653 = vmatprep.subr.bf16.mxu0 0
      %654 = vmatpush1.bf16.msra.mxu0 %v630
      %655 = vmatprep.subr.bf16.mxu0 0
      %656 = vmatpush1.bf16.msra.mxu0 0
      %657 = vmatprep.subr.bf16.mxu0 0
      %658 = vmatpush1.bf16.msra.mxu0 0
      %659 = vmatprep.subr.bf16.mxu0 0
      %660 = vmatpush1.bf16.msra.mxu0 0
      %661 = vmatprep.subr.bf16.mxu0 0
      %662 = vmatpush1.bf16.msra.mxu0 0
      %663 = vmatprep.subr.bf16.mxu0 0
      %664 = vmatpush1.bf16.msra.mxu0 0
      %665 = vmatprep.subr.bf16.mxu0 0
      %666 = vmatpush1.bf16.msra.mxu0 0
      %667 = vmatprep.subr.bf16.mxu0 0
      %668 = vmatpush1.bf16.msra.mxu0 0
      %669 = vmatprep.subr.bf16.mxu0 0
      %670 = vmatpush1.bf16.msra.mxu0 0
      %671 = vmatprep.mubr.bf16.mxu0 0
      %672 = vmatmul.mubr.bf16.gmra.mrb[0].mxu0 %v565
      %v673 = vpop.f32.mrb[0].mxu0
      %v674 = vadd.f32 %v589, %v673
      %v675 = vpop.f32.mrb[0].mxu0
      %v676 = vpop.f32.mrb[0].mxu0
      %v677 = vadd.f32 %v589, %v676
      %v678 = vpop.f32.mrb[0].mxu0
      %679 = vmatprep.mubr.bf16.mxu0 0
      %680 = vmatmul.mubr.bf16.gmra.mrb[0].mxu0 %v566
      %v681 = vpop.f32.mrb[0].mxu0
      %v682 = vadd.f32 %v589, %v681
      %v683 = vpop.f32.mrb[0].mxu0
      %v684 = vpop.f32.mrb[0].mxu0
      %v685 = vadd.f32 %v589, %v684
      %v686 = vpop.f32.mrb[0].mxu0
      %687 = vmatprep.mubr.bf16.mxu0 0
      %688 = vmatmul.mubr.bf16.gmra.mrb[0].mxu0 %v567
      %v689 = vpop.f32.mrb[0].mxu0
      %v690 = vadd.f32 %v589, %v689
      %v691 = vpop.f32.mrb[0].mxu0
      %v692 = vpop.f32.mrb[0].mxu0
      %v693 = vadd.f32 %v589, %v692
      %v694 = vpop.f32.mrb[0].mxu0
      %695 = vdwg.mxu0
      %v696 = vmax.f32 %v674, 0.0
      %v697 = vmax.f32 %v677, 0.0
      %v698 = vmax.f32 %v682, 0.0
      %v699 = vmax.f32 %v685, 0.0
      %v700 = vmax.f32 %v690, 0.0
      %v701 = vmax.f32 %v693, 0.0
      %v702 = vpack.c.bf16 %v697, %v696
      %v703 = vpack.c.bf16 %v699, %v698
      %v704 = vpack.c.bf16 %v701, %v700
      %v705 = vld [vmem:[%s6] sm:$0xf]
      %v706 = vld [vmem:[%s6 + $0x4] sm:$0xf]
      %v707 = vld [vmem:[%s6 + $0x8] sm:$0xf]
      %v708 = vld [vmem:[%s6 + $0xc] sm:$0xf]
      %v709 = vld [vmem:[%s6 + $0x10] sm:$0xf]
      %v710 = vld [vmem:[%s6 + $0x14] sm:$0xf]
      %v711 = vld [vmem:[%s6 + $0x18] sm:$0xf]
      %v712 = vld [vmem:[%s6 + $0x1c] sm:$0xf]
      %v713 = vld [vmem:[%s6 + $0x20] sm:$0xf]
      %v714 = vld [vmem:[%s6 + $0x24] sm:$0xf]
      %v715 = vld [vmem:[%s6 + $0x28] sm:$0xf]
      %v716 = vld [vmem:[%s6 + $0x2c] sm:$0xf]
      %v717 = vld [vmem:[%s6 + $0x30] sm:$0xf]
      %v718 = vld [vmem:[%s6 + $0x34] sm:$0xf]
      %v719 = vld [vmem:[%s6 + $0x38] sm:$0xf]
      %v720 = vld [vmem:[%s6 + $0x3c] sm:$0xf]
      %v721 = vld [vmem:[%s7] sm:$0x1]
      %v723 = vlaneseq
      %v724 = vshrl.u32 %v723, 7
      %v725 = vsub.s32 0, %v724
      %v726 = vrot.slane %v721, %v725
      %v744 = vunpack.c.l.b16 %v705
      %v745 = vunpack.c.l.b16 %v706
      %v746 = vunpack.c.l.b16 %v707
      %v747 = vunpack.c.l.b16 %v708
      %v748 = vunpack.c.l.b16 %v709
      %v749 = vunpack.c.l.b16 %v710
      %v750 = vunpack.c.l.b16 %v711
      %v751 = vunpack.c.l.b16 %v712
      %v752 = vunpack.c.l.b16 %v713
      %v753 = vunpack.c.l.b16 %v714
      %v754 = vunpack.c.l.b16 %v715
      %v755 = vunpack.c.l.b16 %v716
      %v756 = vunpack.c.l.b16 %v717
      %v757 = vunpack.c.l.b16 %v718
      %v758 = vunpack.c.l.b16 %v719
      %v759 = vunpack.c.l.b16 %v720
      %v760 = vpack.c.b16 %v745, %v744
      %v761 = vpack.c.b16 %v747, %v746
      %v762 = vpack.c.b16 %v749, %v748
      %v763 = vpack.c.b16 %v751, %v750
      %v764 = vpack.c.b16 %v753, %v752
      %v765 = vpack.c.b16 %v755, %v754
      %v766 = vpack.c.b16 %v757, %v756
      %v767 = vpack.c.b16 %v759, %v758
      %776 = vmatprep.subr.bf16.mxu0 0
      %777 = vmatpush1.bf16.msra.mxu0 %v760
      %778 = vmatprep.subr.bf16.mxu0 0
      %779 = vmatpush1.bf16.msra.mxu0 %v761
      %780 = vmatprep.subr.bf16.mxu0 0
      %781 = vmatpush1.bf16.msra.mxu0 %v762
      %782 = vmatprep.subr.bf16.mxu0 0
      %783 = vmatpush1.bf16.msra.mxu0 %v763
      %784 = vmatprep.subr.bf16.mxu0 0
      %785 = vmatpush1.bf16.msra.mxu0 %v764
      %786 = vmatprep.subr.bf16.mxu0 0
      %787 = vmatpush1.bf16.msra.mxu0 %v765
      %788 = vmatprep.subr.bf16.mxu0 0
      %789 = vmatpush1.bf16.msra.mxu0 %v766
      %790 = vmatprep.subr.bf16.mxu0 0
      %791 = vmatpush1.bf16.msra.mxu0 %v767
      %792 = vmatprep.subr.bf16.mxu0 0
      %793 = vmatpush1.bf16.msra.mxu0 0
      %794 = vmatprep.subr.bf16.mxu0 0
      %795 = vmatpush1.bf16.msra.mxu0 0
      %796 = vmatprep.subr.bf16.mxu0 0
      %797 = vmatpush1.bf16.msra.mxu0 0
      %798 = vmatprep.subr.bf16.mxu0 0
      %799 = vmatpush1.bf16.msra.mxu0 0
      %800 = vmatprep.subr.bf16.mxu0 0
      %801 = vmatpush1.bf16.msra.mxu0 0
      %802 = vmatprep.subr.bf16.mxu0 0
      %803 = vmatpush1.bf16.msra.mxu0 0
      %804 = vmatprep.subr.bf16.mxu0 0
      %805 = vmatpush1.bf16.msra.mxu0 0
      %806 = vmatprep.subr.bf16.mxu0 0
      %807 = vmatpush1.bf16.msra.mxu0 0
      %808 = vmatprep.mubr.bf16.mxu0 0
      %809 = vmatmul.mubr.bf16.gmra.mrb[0].mxu0 %v702
      %v810 = vpop.f32.mrb[0].mxu0
      %v811 = vadd.f32 %v726, %v810
      %v812 = vpop.f32.mrb[0].mxu0
      %v813 = vpop.f32.mrb[0].mxu0
      %v814 = vadd.f32 %v726, %v813
      %v815 = vpop.f32.mrb[0].mxu0
      %816 = vmatprep.mubr.bf16.mxu0 0
      %817 = vmatmul.mubr.bf16.gmra.mrb[0].mxu0 %v703
      %v818 = vpop.f32.mrb[0].mxu0
      %v819 = vadd.f32 %v726, %v818
      %v820 = vpop.f32.mrb[0].mxu0
      %v821 = vpop.f32.mrb[0].mxu0
      %v822 = vadd.f32 %v726, %v821
      %v823 = vpop.f32.mrb[0].mxu0
      %824 = vmatprep.mubr.bf16.mxu0 0
      %825 = vmatmul.mubr.bf16.gmra.mrb[0].mxu0 %v704
      %v826 = vpop.f32.mrb[0].mxu0
      %v827 = vadd.f32 %v726, %v826
      %v828 = vpop.f32.mrb[0].mxu0
      %v829 = vpop.f32.mrb[0].mxu0
      %v830 = vadd.f32 %v726, %v829
      %v831 = vpop.f32.mrb[0].mxu0
      %832 = vdwg.mxu0
      %v833 = vld [vmem:[%s358] sm:$0xff]
      %v834 = vld [vmem:[%s358 + $0x8] sm:$0xff]
      %v835 = vld [vmem:[%s358 + $0x10] sm:$0xff]
      %v836 = vld [vmem:[%s358 + $0x18] sm:$0xff]
      %v837 = vld [vmem:[%s358 + $0x20] sm:$0xff]
      %v838 = vld [vmem:[%s358 + $0x28] sm:$0xff]
      %v839 = vmax.f32 %v833, 0.0
      %v840 = vmax.f32 %v834, 0.0
      %v841 = vmax.f32 %v835, 0.0
      %v842 = vmax.f32 %v836, 0.0
      %v843 = vmax.f32 %v837, 0.0
      %v844 = vmax.f32 %v838, 0.0
      %v845 = vmin.f32 %v839, 1.0
      %v846 = vmin.f32 %v840, 1.0
      %v847 = vmin.f32 %v841, 1.0
      %v848 = vmin.f32 %v842, 1.0
      %v849 = vmin.f32 %v843, 1.0
      %v850 = vmin.f32 %v844, 1.0
      %v851 = vmax.f32 %v845, 0.001
      %v852 = vmax.f32 %v846, 0.001
      %v853 = vmax.f32 %v847, 0.001
      %v854 = vmax.f32 %v848, 0.001
      %v855 = vmax.f32 %v849, 0.001
      %v856 = vmax.f32 %v850, 0.001
      %v857 = vsub.f32 1.0, %v845
      %v858 = vsub.f32 1.0, %v846
      %v859 = vsub.f32 1.0, %v847
      %v860 = vsub.f32 1.0, %v848
      %v861 = vsub.f32 1.0, %v849
      %v862 = vsub.f32 1.0, %v850
      %v863 = vmax.f32 %v857, 0.001
      %v864 = vmax.f32 %v858, 0.001
      %v865 = vmax.f32 %v859, 0.001
      %v866 = vmax.f32 %v860, 0.001
      %v867 = vmax.f32 %v861, 0.001
      %v868 = vmax.f32 %v862, 0.001
      %v869 = vrcp.pop %v863
      %v870 = vmul.f32 %v851, %v869
      %v871 = vrcp.pop %v864
      %v872 = vmul.f32 %v852, %v871
      %v873 = vrcp.pop %v865
      %v874 = vmul.f32 %v853, %v873
      %v875 = vrcp.pop %v866
      %v876 = vmul.f32 %v854, %v875
      %v877 = vrcp.pop %v867
      %v878 = vmul.f32 %v855, %v877
      %v879 = vrcp.pop %v868
      %v880 = vmul.f32 %v856, %v879
      %v881 = vlog2.pop %v870
      %v882 = vmul.f32 %v881, 0.6931472
      %v883 = vlog2.pop %v872
      %v884 = vmul.f32 %v883, 0.6931472
      %v885 = vlog2.pop %v874
      %v886 = vmul.f32 %v885, 0.6931472
      %v887 = vlog2.pop %v876
      %v888 = vmul.f32 %v887, 0.6931472
      %v889 = vlog2.pop %v878
      %v890 = vmul.f32 %v889, 0.6931472
      %v891 = vlog2.pop %v880
      %v892 = vmul.f32 %v891, 0.6931472
      %v893 = vadd.f32 %v811, %v882
      %v894 = vadd.f32 %v814, %v884
      %v895 = vadd.f32 %v819, %v886
      %v896 = vadd.f32 %v822, %v888
      %v897 = vadd.f32 %v827, %v890
      %v898 = vadd.f32 %v830, %v892
      %v899 = vxor.u32 %v893, 2147483648
      %v900 = vxor.u32 %v894, 2147483648
      %v901 = vxor.u32 %v895, 2147483648
      %v902 = vxor.u32 %v896, 2147483648
      %v903 = vxor.u32 %v897, 2147483648
      %v904 = vxor.u32 %v898, 2147483648
      %v905 = vmul.f32 %v899, 1.442695
      %v906 = vpow.pop %v905
      %v907 = vmul.f32 %v900, 1.442695
      %v908 = vpow.pop %v907
      %v909 = vmul.f32 %v901, 1.442695
      %v910 = vpow.pop %v909
      %v911 = vmul.f32 %v902, 1.442695
      %v912 = vpow.pop %v911
      %v913 = vmul.f32 %v903, 1.442695
      %v914 = vpow.pop %v913
      %v915 = vmul.f32 %v904, 1.442695
      %v916 = vpow.pop %v915
      %v917 = vadd.f32 %v906, 1.0
      %v918 = vadd.f32 %v908, 1.0
      %v919 = vadd.f32 %v910, 1.0
      %v920 = vadd.f32 %v912, 1.0
      %v921 = vadd.f32 %v914, 1.0
      %v922 = vadd.f32 %v916, 1.0
      %v923 = vrcp.pop %v917
      %v924 = vmul.f32 1.0, %v923
      %v925 = vrcp.pop %v918
      %v926 = vmul.f32 1.0, %v925
      %v927 = vrcp.pop %v919
      %v928 = vmul.f32 1.0, %v927
      %v929 = vrcp.pop %v920
      %v930 = vmul.f32 1.0, %v929
      %v931 = vrcp.pop %v921
      %v932 = vmul.f32 1.0, %v931
      %v933 = vrcp.pop %v922
      %v934 = vmul.f32 1.0, %v933
      %935 = vst [vmem:[%s370] sm:$0xff] %v924
      %936 = vst [vmem:[%s370 + $0x8] sm:$0xff] %v926
      %937 = vst [vmem:[%s370 + $0x10] sm:$0xff] %v928
      %938 = vst [vmem:[%s370 + $0x18] sm:$0xff] %v930
      %939 = vst [vmem:[%s370 + $0x20] sm:$0xff] %v932
      %940 = vst [vmem:[%s370 + $0x28] sm:$0xff] %v934
      %s941 = smul.u32 6, %s21
      %p942 = scmp.lt.s32.totalorder %s941, 11
      %s943 = scalar_select %p942, %s941, 11
      %s944 = smul.addr %s943, 8
      %s945 = scalar_lea.vmem %s8, %s944
      %s946 = smul.u32 6, %s21
      %p947 = scmp.lt.s32.totalorder %s946, 11
      %s948 = scalar_select %p947, %s946, 11
      %s949 = smul.addr %s948, 8
      %s950 = scalar_lea.vmem %s9, %s949
      // Predicated region
      $region53: #{dino_head_forward.3} parent=51 // pred_check
        %p951 = pneg %p217
      $region54: #{dino_head_forward.3} parent=51 // pred_check_branch
        %953 = sbr.rel (%p951) target = $region56
      $region55: #{dino_head_forward.3} parent=51 // pred_region
        %s954 = smul.u32 6, %s21
      $region56: #{dino_head_forward.3} parent=51 // pred_fallthru
        _
      // Predicated region
      $region57: #{dino_head_forward.3} parent=51 // pred_check
        %p955 = pneg %p243
      $region58: #{dino_head_forward.3} parent=51 // pred_check_branch
        %957 = sbr.rel (%p955) target = $region60
      $region59: #{dino_head_forward.3} parent=51 // pred_region
        %s958 = smul.u32 6, %s21
      $region60: #{dino_head_forward.3} parent=51 // pred_fallthru
        _
    $region52: #{dino_head_forward.3} parent=5 // pred_fallthru
      _
    %p959 = scmp.le.s32.totalorder 2, %s16
    // Predicated region
    $region61: #{dino_head_forward.3} parent=5 // pred_check
      %p960 = pneg %p959
    $region62: #{dino_head_forward.3} parent=5 // pred_check_branch
      %962 = sbr.rel (%p960) target = $region64
    $region63: #{dino_head_forward.3} parent=5 // pred_region
      %s963 = ssub.s32 %s16, 2
      // Predicated region
      $region65: #{dino_head_forward.3} parent=63 // pred_check
        %p964 = pneg %p223
      $region66: #{dino_head_forward.3} parent=63 // pred_check_branch
        %966 = sbr.rel (%p964) target = $region68
      $region67: #{dino_head_forward.3} parent=63 // pred_region
        %s967 = smul.u32 6, %s22
        %p968 = scmp.lt.s32.totalorder %s967, 11
        %s969 = scalar_select %p968, %s967, 11
        %s970 = smul.addr %s969, 8
        %s971 = scalar_lea.vmem %s8, %s970
      $region68: #{dino_head_forward.3} parent=63 // pred_fallthru
        _
      // Predicated region
      $region69: #{dino_head_forward.3} parent=63 // pred_check
        %p972 = pneg %p249
      $region70: #{dino_head_forward.3} parent=63 // pred_check_branch
        %974 = sbr.rel (%p972) target = $region72
      $region71: #{dino_head_forward.3} parent=63 // pred_region
        %s975 = smul.u32 6, %s22
        %p976 = scmp.lt.s32.totalorder %s975, 11
        %s977 = scalar_select %p976, %s975, 11
        %s978 = smul.addr %s977, 8
        %s979 = scalar_lea.vmem %s9, %s978
      $region72: #{dino_head_forward.3} parent=63 // pred_fallthru
        _
    $region64: #{dino_head_forward.3} parent=5 // pred_fallthru
      _
  $region6: #{dino_head_forward.3} parent=0 // loop_footer
    %s20 = sadd.s32 1, %s16
  $region7: #{dino_head_forward.3} parent=0 // loop_footer_branch
    %15 = sbr.rel target = $region3
  $region8: #{dino_head_forward.3} parent=0 // loop_exit
    _

</llo_original>
